<compile_context>
chip_gen: v5e
topology: v5e:2x2
jax: 0.10.0
libtpu: 0.0.40
codegen_flags: <defaults>
</compile_context>

<pallas_src>
import functools

import jax
import jax.numpy as jnp
from jax import lax
from jax.experimental import pallas as pl
from jax.experimental.pallas import tpu as pltpu


# ----------------------------- activations ---------------------------------
def _hswish(x):
    return x * jnp.clip(x + 3.0, 0.0, 6.0) * (1.0 / 6.0)


def _hsigmoid(x):
    return jnp.clip(x + 3.0, 0.0, 6.0) * (1.0 / 6.0)


def _relu(x):
    return jnp.maximum(x, 0.0)


# ------------------------------- kernel ------------------------------------
def _make_kernel(*, Bblk, H, W, Hp, Wp, Cin, E, Cout, K, stride, pad, Wo, Hc,
                 nl, se, use_res, mm_dtype):
    WE = W * E
    act = _hswish if nl == "HS" else _relu

    def kernel(*refs):
        if se:
            (x_ref, w1_ref, s1_ref, b1_ref, wdw_ref, s2_ref, b2_ref,
             rsum_ref, sew1_ref, sew2_ref, w3_ref, s3_ref, b3_ref, o_ref) = refs
        else:
            (x_ref, w1_ref, s1_ref, b1_ref, wdw_ref, s2_ref, b2_ref,
             w3_ref, s3_ref, b3_ref, o_ref) = refs

        xv = x_ref[...]                                     # (Bblk, Hp, Wp*Cin)

        # ---- 1x1 expansion conv + BN1 + activation (MXU, lane-dense output) ----
        x2d = xv.reshape(Bblk * Hp, Wp * Cin).astype(mm_dtype)
        t = jnp.dot(x2d, w1_ref[...], preferred_element_type=jnp.float32)
        t = act(t * s1_ref[...] + b1_ref[...])              # (Bblk*Hp, Wp*E) f32
        t = t.reshape(Bblk, Hp, Wp * E)

        # Re-zero the spatial padding ring (BN bias + activation made it nonzero).
        row = lax.broadcasted_iota(jnp.int32, (1, Hp, 1), 1)
        lane = lax.broadcasted_iota(jnp.int32, (1, 1, Wp * E), 2)
        interior = ((row >= pad) & (row < pad + H)
                    & (lane >= pad * E) & (lane < (pad + W) * E))
        t = jnp.where(interior, t, 0.0)

        # ---- KxK depthwise conv + BN2: lane-dense (rows x W*E) on the VPU ----
        acc = jnp.zeros((Bblk, Hc, WE), jnp.float32)
        for ki in range(K):
            for kj in range(K):
                win = t[:, ki:ki + Hc, kj * E:kj * E + WE]
                wtap = wdw_ref[ki * K + kj:ki * K + kj + 1, :]   # (1, WE)
                acc = acc + win * wtap
        dw = acc * s2_ref[...] + b2_ref[...]                # (Bblk, Hc, WE)

        # ---- squeeze-and-excite (spatial mean / decimation folded into rsum) ----
        if se:
            if stride > 1:
                keep = (lax.broadcasted_iota(jnp.int32, (1, Hc, 1), 1)
                        % stride) == 0
                ssum = jnp.sum(jnp.where(keep, dw, 0.0), axis=1)
            else:
                ssum = jnp.sum(dw, axis=1)                  # (Bblk, WE)
            y = jnp.dot(ssum.astype(mm_dtype), rsum_ref[...],
                        preferred_element_type=jnp.float32)          # (Bblk, E)
            y = jnp.maximum(
                jnp.dot(y.astype(mm_dtype), sew1_ref[...],
                        preferred_element_type=jnp.float32), 0.0)    # (Bblk, R)
            y = _hsigmoid(jnp.dot(y.astype(mm_dtype), sew2_ref[...],
                                  preferred_element_type=jnp.float32))  # (Bblk, WE)
            dw = dw * y[:, None, :]

        dw = act(dw)

        # ---- 1x1 projection conv + BN3 (+ residual), MXU, lane-dense store ----
        out = jnp.dot(dw.reshape(Bblk * Hc, WE).astype(mm_dtype), w3_ref[...],
                      preferred_element_type=jnp.float32)
        out = out * s3_ref[...] + b3_ref[...]               # (Bblk*Hc, Wo*Cout)
        out = out.reshape(Bblk, Hc, Wo * Cout)
        if use_res:
            out = out + xv[:, pad:pad + H,
                           pad * Cin:(pad + W) * Cin].astype(jnp.float32)
        o_ref[...] = out.astype(o_ref.dtype)

    return kernel


# ------------------------------- wrapper ------------------------------------
def mobile_bottleneck_pallas(x_nchw, p, *, kernel_size, stride, se, nl,
                             mm_dtype=jnp.bfloat16):
    """x_nchw: (B, Cin, H, W). Returns (B, Cout, Ho, Wo)."""
    assert stride in (1, 2) and kernel_size in (3, 5) and nl in ("RE", "HS")
    B, Cin, H, W = x_nchw.shape
    K = kernel_size
    pad = (K - 1) // 2
    E = p["w1"].shape[1]
    Cout = p["w3"].shape[1]
    Ho = (H + 2 * pad - K) // stride + 1
    Wo = (W + 2 * pad - K) // stride + 1
    Hc = stride * Ho                        # rows computed in-kernel (pre-decimation)
    Hp = max(H + 2 * pad, Hc + K - 1)       # padded rows the taps may touch
    Wp = W + 2 * pad
    use_res = (stride == 1) and (Cin == Cout)
    f32 = jnp.float32

    # ---- input: NCHW -> zero-padded NHWC with W folded into the lane dim ----
    x = jnp.transpose(x_nchw, (0, 2, 3, 1))
    x = jnp.pad(x, ((0, 0), (pad, Hp - H - pad), (pad, pad), (0, 0)))
    x = x.reshape(B, Hp, Wp * Cin)

    # ---- wrapper-side weight preparation (all lane-dense) ----
    w1_bd = jnp.kron(jnp.eye(Wp, dtype=f32),
                     p["w1"].astype(f32)).astype(mm_dtype)     # (Wp*Cin, Wp*E)
    sel = (jnp.arange(W)[:, None] == stride * jnp.arange(Wo)[None, :]).astype(f32)
    w3_bd = jnp.kron(sel, p["w3"].astype(f32)).astype(mm_dtype)  # (W*E, Wo*Cout)

    def lane_tile(v, reps):                 # (1, C) -> (1, reps*C)
        return jnp.tile(v.astype(f32), (1, reps))

    s1_t, b1_t = lane_tile(p["s1"], Wp), lane_tile(p["b1"], Wp)
    s2_t, b2_t = lane_tile(p["s2"], W), lane_tile(p["b2"], W)
    s3_t, b3_t = lane_tile(p["s3"], Wo), lane_tile(p["b3"], Wo)
    wdw_t = jnp.tile(p["wdw"].astype(f32), (1, 1, W)).reshape(K * K, W * E)

    weights = [w1_bd, s1_t, b1_t, wdw_t, s2_t, b2_t]
    flops = 2 * B * (H * W * Cin * E + K * K * Ho * Wo * E + Ho * Wo * E * Cout)
    if se:
        R = p["sew1"].shape[1]
        keep = ((jnp.arange(W) % stride == 0)
                & (jnp.arange(W) // stride < Wo)).astype(f32)
        rsum = (jnp.kron(keep[:, None], jnp.eye(E, dtype=f32))
                / float(Ho * Wo)).astype(mm_dtype)             # masked spatial mean
        tile_mat = jnp.kron(jnp.ones((1, W), f32), jnp.eye(E, dtype=f32))
        sew2_t = (p["sew2"].astype(f32) @ tile_mat).astype(mm_dtype)  # (R, W*E)
        weights += [rsum, p["sew1"].astype(mm_dtype), sew2_t]
        flops += 2 * B * (Ho * Wo * E + 2 * E * R)
    weights += [w3_bd, s3_t, b3_t]

    # ---- batch blocking: as many images per grid step as fit a VMEM budget ----
    bytes_per_img = 4 * (Hp * Wp * Cin + 2 * Hp * Wp * E + 2 * Hc * W * E
                         + Hc * Wo * Cout)
    Bblk = min(B, max(1, (6 * 1024 * 1024) // max(1, bytes_per_img)))
    while B % Bblk:
        Bblk -= 1
    grid = (B // Bblk,)

    kernel = _make_kernel(Bblk=Bblk, H=H, W=W, Hp=Hp, Wp=Wp, Cin=Cin, E=E,
                          Cout=Cout, K=K, stride=stride, pad=pad, Wo=Wo, Hc=Hc,
                          nl=nl, se=se, use_res=use_res, mm_dtype=mm_dtype)

    in_specs = ([pl.BlockSpec((Bblk, Hp, Wp * Cin), lambda b: (b, 0, 0))]
                + [pl.BlockSpec(w.shape, lambda b: (0, 0)) for w in weights])
    out_spec = pl.BlockSpec((Bblk, Hc, Wo * Cout), lambda b: (b, 0, 0))

    bytes_accessed = (int(x.size) * x.dtype.itemsize
                      + B * Hc * Wo * Cout * x_nchw.dtype.itemsize
                      + sum(int(w.size) * w.dtype.itemsize for w in weights))

    out = pl.pallas_call(
        kernel,
        out_shape=jax.ShapeDtypeStruct((B, Hc, Wo * Cout), x_nchw.dtype),
        grid_spec=pltpu.PrefetchScalarGridSpec(
            num_scalar_prefetch=0, grid=grid,
            in_specs=in_specs, out_specs=out_spec),
        compiler_params=pltpu.CompilerParams(
            dimension_semantics=("parallel",),
            vmem_limit_bytes=64 * 1024 * 1024),
        cost_estimate=pl.CostEstimate(flops=int(flops), transcendentals=0,
                                      bytes_accessed=int(bytes_accessed)),
    )(x, *weights)

    # drop extra rows computed for stride>1, unfold W, back to NCHW
    out = out[:, ::stride, :].reshape(B, Ho, Wo, Cout)
    return jnp.transpose(out, (0, 3, 1, 2))


# ----------------------- pure-JAX reference (NHWC) ---------------------------
def mobile_bottleneck_ref(x_nchw, p, *, kernel_size, stride, se, nl):
    x = jnp.transpose(x_nchw, (0, 2, 3, 1)).astype(jnp.float32)
    Cin, Cout = x.shape[-1], p["w3"].shape[1]
    pad = (kernel_size - 1) // 2
    use_res = (stride == 1) and (Cin == Cout)
    act = _hswish if nl == "HS" else _relu

    t = jnp.einsum("bhwc,ce->bhwe", x, p["w1"]) * p["s1"] + p["b1"]
    t = act(t)
    dw = lax.conv_general_dilated(
        t, p["wdw"].reshape(kernel_size, kernel_size, 1, -1),
        window_strides=(stride, stride),
        padding=[(pad, pad), (pad, pad)],
        dimension_numbers=("NHWC", "HWIO", "NHWC"),
        feature_group_count=t.shape[-1])
    dw = dw * p["s2"] + p["b2"]
    if se:
        y = jnp.mean(dw, axis=(1, 2))                       # (B, E)
        y = jnp.maximum(y @ p["sew1"], 0.0)
        y = _hsigmoid(y @ p["sew2"])
        dw = dw * y[:, None, None, :]
    dw = act(dw)
    out = jnp.einsum("bhwe,eo->bhwo", dw, p["w3"]) * p["s3"] + p["b3"]
    if use_res:
        out = out + x
    return jnp.transpose(out, (0, 3, 1, 2))


# ------------------------------- params --------------------------------------
def make_params(key, inp, oup, exp, kernel_size, reduction=4, eps=1e-5):
    def bn_fold(k, c):
        k1, k2, k3, k4 = jax.random.split(k, 4)
        gamma = jax.random.uniform(k1, (1, c), jnp.float32, 0.5, 1.5)
        beta = 0.1 * jax.random.normal(k2, (1, c), jnp.float32)
        mean = 0.1 * jax.random.normal(k3, (1, c), jnp.float32)
        var = jax.random.uniform(k4, (1, c), jnp.float32, 0.5, 1.5)
        scale = gamma / jnp.sqrt(var + eps)
        bias = beta - mean * scale
        return scale, bias

    ks = jax.random.split(key, 8)
    r = exp // reduction
    p = {}
    p["w1"] = 0.1 * jax.random.normal(ks[0], (inp, exp), jnp.float32)
    p["s1"], p["b1"] = bn_fold(ks[1], exp)
    p["wdw"] = 0.1 * jax.random.normal(ks[2], (kernel_size, kernel_size, exp),
                                       jnp.float32)
    p["s2"], p["b2"] = bn_fold(ks[3], exp)
    p["sew1"] = 0.1 * jax.random.normal(ks[4], (exp, r), jnp.float32)
    p["sew2"] = 0.1 * jax.random.normal(ks[5], (r, exp), jnp.float32)
    p["w3"] = 0.1 * jax.random.normal(ks[6], (exp, oup), jnp.float32)
    p["s3"], p["b3"] = bn_fold(ks[7], oup)
    return p


# --------------------------------- main ---------------------------------------
def _check(x, p, cfg):
    ref = mobile_bottleneck_ref(x, p, **cfg)
    # exact-path check (f32 matmuls) + fast-path check (bf16 matmuls, f32 accum)
    for mm_dtype, atol, rtol in ((jnp.float32, 1e-3, 1e-3),
                                 (jnp.bfloat16, 3e-2, 3e-2)):
        run = jax.jit(functools.partial(mobile_bottleneck_pallas,
                                        mm_dtype=mm_dtype, **cfg))
        out = jax.block_until_ready(run(x, p))
        assert out.shape == ref.shape, (out.shape, ref.shape)
        err = float(jnp.max(jnp.abs(out - ref)))
        assert jnp.allclose(out, ref, atol=atol, rtol=rtol), (str(mm_dtype), err)


if __name__ == "__main__":
    key = jax.random.PRNGKey(0)
    k1, k2, k3, k4 = jax.random.split(key, 4)

    # Test 1: MobileBottleneck(inp=8, oup=8, kernel=3, stride=1, exp=16,
    #                          se=True, nl='HS') on 16x16 maps, batch=2.
    B, INP, OUP, EXP, KSZ, STRIDE = 2, 8, 8, 16, 3, 1
    H = W = 16
    x1 = jax.random.normal(k1, (B, INP, H, W), jnp.float32)   # NCHW like PyTorch
    p1 = make_params(k2, INP, OUP, EXP, KSZ)
    _check(x1, p1, dict(kernel_size=KSZ, stride=STRIDE, se=True, nl="HS"))

    # Test 2: stride=2, kernel=5, no SE, ReLU (exercises the general path).
    B2, INP2, OUP2, EXP2, KSZ2, STRIDE2 = 2, 8, 16, 24, 5, 2
    x2 = jax.random.normal(k3, (B2, INP2, H, W), jnp.float32)
    p2 = make_params(k4, INP2, OUP2, EXP2, KSZ2)
    _check(x2, p2, dict(kernel_size=KSZ2, stride=STRIDE2, se=False, nl="RE"))

    print("KERNEL_OK")
</pallas_src>

<mosaic_0001>
module attributes {stable_mosaic.version = 11 : i64} {
  func.func @kernel(%arg0: i32, %arg1: memref<2x18x144xf32, #tpu.memory_space<vmem>>, %arg2: memref<144x288xf32, #tpu.memory_space<vmem>>, %arg3: memref<1x288xf32, #tpu.memory_space<vmem>>, %arg4: memref<1x288xf32, #tpu.memory_space<vmem>>, %arg5: memref<9x256xf32, #tpu.memory_space<vmem>>, %arg6: memref<1x256xf32, #tpu.memory_space<vmem>>, %arg7: memref<1x256xf32, #tpu.memory_space<vmem>>, %arg8: memref<256x16xf32, #tpu.memory_space<vmem>>, %arg9: memref<16x4xf32, #tpu.memory_space<vmem>>, %arg10: memref<4x256xf32, #tpu.memory_space<vmem>>, %arg11: memref<256x128xf32, #tpu.memory_space<vmem>>, %arg12: memref<1x128xf32, #tpu.memory_space<vmem>>, %arg13: memref<1x128xf32, #tpu.memory_space<vmem>>, %arg14: memref<2x16x128xf32, #tpu.memory_space<vmem>>) attributes {dimension_semantics = [#tpu.dimension_semantics<parallel>], iteration_bounds = array<i64: 1>, scalar_prefetch = 0 : i64, scratch_operands = 0 : i64, tpu.core_type = #tpu.core_type<tc>, window_params = [{transform_indices = @transform_0, window_bounds = array<i64: 2, 18, 144>}, {pipeline_mode = #tpu.pipeline_mode<synchronous>, transform_indices = @transform_1, window_bounds = array<i64: 144, 288>}, {pipeline_mode = #tpu.pipeline_mode<synchronous>, transform_indices = @transform_2, window_bounds = array<i64: 1, 288>}, {pipeline_mode = #tpu.pipeline_mode<synchronous>, transform_indices = @transform_3, window_bounds = array<i64: 1, 288>}, {pipeline_mode = #tpu.pipeline_mode<synchronous>, transform_indices = @transform_4, window_bounds = array<i64: 9, 256>}, {pipeline_mode = #tpu.pipeline_mode<synchronous>, transform_indices = @transform_5, window_bounds = array<i64: 1, 256>}, {pipeline_mode = #tpu.pipeline_mode<synchronous>, transform_indices = @transform_6, window_bounds = array<i64: 1, 256>}, {pipeline_mode = #tpu.pipeline_mode<synchronous>, transform_indices = @transform_7, window_bounds = array<i64: 256, 16>}, {pipeline_mode = #tpu.pipeline_mode<synchronous>, transform_indices = @transform_8, window_bounds = array<i64: 16, 4>}, {pipeline_mode = #tpu.pipeline_mode<synchronous>, transform_indices = @transform_9, window_bounds = array<i64: 4, 256>}, {pipeline_mode = #tpu.pipeline_mode<synchronous>, transform_indices = @transform_10, window_bounds = array<i64: 256, 128>}, {pipeline_mode = #tpu.pipeline_mode<synchronous>, transform_indices = @transform_11, window_bounds = array<i64: 1, 128>}, {pipeline_mode = #tpu.pipeline_mode<synchronous>, transform_indices = @transform_12, window_bounds = array<i64: 1, 128>}, {transform_indices = @transform_13, window_bounds = array<i64: 2, 16, 128>}]} {
    %c0 = arith.constant 0 : index
    %c0_0 = arith.constant 0 : index
    %c0_1 = arith.constant 0 : index
    %0 = vector.load %arg1[%c0, %c0_0, %c0_1] : memref<2x18x144xf32, #tpu.memory_space<vmem>>, vector<2x18x144xf32>
    %1 = vector.shape_cast %0 : vector<2x18x144xf32> to vector<36x144xf32>
    %c0_2 = arith.constant 0 : index
    %c0_3 = arith.constant 0 : index
    %2 = vector.load %arg2[%c0_2, %c0_3] : memref<144x288xf32, #tpu.memory_space<vmem>>, vector<144x288xf32>
    %cst = arith.constant dense<0.000000e+00> : vector<36x288xf32>
    %3 = tpu.matmul %1, %2, %cst {dimension_numbers = #tpu.dot_dimension_numbers<[1], [0], [0], [1], [0, 0, 1, 1], [], []>} : vector<36x144xf32>, vector<144x288xf32>, vector<36x288xf32> -> vector<36x288xf32>
    %c0_4 = arith.constant 0 : index
    %c0_5 = arith.constant 0 : index
    %4 = vector.load %arg3[%c0_4, %c0_5] : memref<1x288xf32, #tpu.memory_space<vmem>>, vector<1x288xf32>
    %5 = vector.broadcast %4 : vector<1x288xf32> to vector<36x288xf32>
    %6 = arith.mulf %3, %5 : vector<36x288xf32>
    %c0_6 = arith.constant 0 : index
    %c0_7 = arith.constant 0 : index
    %7 = vector.load %arg4[%c0_6, %c0_7] : memref<1x288xf32, #tpu.memory_space<vmem>>, vector<1x288xf32>
    %8 = vector.broadcast %7 : vector<1x288xf32> to vector<36x288xf32>
    %9 = arith.addf %6, %8 : vector<36x288xf32>
    %cst_8 = arith.constant 3.000000e+00 : f32
    %10 = vector.broadcast %cst_8 : f32 to vector<36x288xf32>
    %11 = arith.addf %9, %10 : vector<36x288xf32>
    %cst_9 = arith.constant 0.000000e+00 : f32
    %cst_10 = arith.constant 6.000000e+00 : f32
    %12 = vector.broadcast %cst_9 : f32 to vector<36x288xf32>
    %13 = arith.maximumf %12, %11 : vector<36x288xf32>
    %14 = vector.broadcast %cst_10 : f32 to vector<36x288xf32>
    %15 = arith.minimumf %14, %13 : vector<36x288xf32>
    %16 = arith.mulf %9, %15 : vector<36x288xf32>
    %cst_11 = arith.constant 0.166666672 : f32
    %17 = vector.broadcast %cst_11 : f32 to vector<36x288xf32>
    %18 = arith.mulf %16, %17 : vector<36x288xf32>
    %19 = vector.shape_cast %18 : vector<36x288xf32> to vector<2x18x288xf32>
    %20 = tpu.iota {dimensions = array<i32: 1>} : vector<1x18x1xi32>
    %21 = tpu.iota {dimensions = array<i32: 2>} : vector<1x1x288xi32>
    %c1_i32 = arith.constant 1 : i32
    %22 = vector.broadcast %c1_i32 : i32 to vector<1x18x1xi32>
    %23 = arith.cmpi sge, %20, %22 : vector<1x18x1xi32>
    %c17_i32 = arith.constant 17 : i32
    %24 = vector.broadcast %c17_i32 : i32 to vector<1x18x1xi32>
    %25 = arith.cmpi slt, %20, %24 : vector<1x18x1xi32>
    %26 = arith.andi %23, %25 : vector<1x18x1xi1>
    %c16_i32 = arith.constant 16 : i32
    %27 = vector.broadcast %c16_i32 : i32 to vector<1x1x288xi32>
    %28 = arith.cmpi sge, %21, %27 : vector<1x1x288xi32>
    %29 = vector.broadcast %26 : vector<1x18x1xi1> to vector<1x18x288xi1>
    %30 = vector.broadcast %28 : vector<1x1x288xi1> to vector<1x18x288xi1>
    %31 = arith.andi %29, %30 : vector<1x18x288xi1>
    %c272_i32 = arith.constant 272 : i32
    %32 = vector.broadcast %c272_i32 : i32 to vector<1x1x288xi32>
    %33 = arith.cmpi slt, %21, %32 : vector<1x1x288xi32>
    %34 = vector.broadcast %33 : vector<1x1x288xi1> to vector<1x18x288xi1>
    %35 = arith.andi %31, %34 : vector<1x18x288xi1>
    %cst_12 = arith.constant 0.000000e+00 : f32
    %36 = vector.shape_cast %35 : vector<1x18x288xi1> to vector<1x18x288xi1>
    %37 = vector.broadcast %36 : vector<1x18x288xi1> to vector<2x18x288xi1>
    %38 = vector.broadcast %cst_12 : f32 to vector<2x18x288xf32>
    %39 = arith.select %37, %19, %38 : vector<2x18x288xi1>, vector<2x18x288xf32>
    %cst_13 = arith.constant 0.000000e+00 : f32
    %40 = vector.broadcast %cst_13 : f32 to vector<2x16x256xf32>
    %41 = vector.extract_strided_slice %39 {offsets = [0, 0, 0], sizes = [2, 16, 256], strides = [1, 1, 1]} : vector<2x18x288xf32> to vector<2x16x256xf32>
    %c0_14 = arith.constant 0 : index
    %c0_15 = arith.constant 0 : index
    %42 = vector.load %arg5[%c0_14, %c0_15] : memref<9x256xf32, #tpu.memory_space<vmem>>, vector<1x256xf32>
    %43 = vector.shape_cast %42 : vector<1x256xf32> to vector<1x1x256xf32>
    %44 = vector.broadcast %43 : vector<1x1x256xf32> to vector<2x16x256xf32>
    %45 = arith.mulf %41, %44 : vector<2x16x256xf32>
    %46 = arith.addf %40, %45 : vector<2x16x256xf32>
    %47 = vector.extract_strided_slice %39 {offsets = [0, 0, 16], sizes = [2, 16, 256], strides = [1, 1, 1]} : vector<2x18x288xf32> to vector<2x16x256xf32>
    %c1 = arith.constant 1 : index
    %c0_16 = arith.constant 0 : index
    %48 = vector.load %arg5[%c1, %c0_16] : memref<9x256xf32, #tpu.memory_space<vmem>>, vector<1x256xf32>
    %49 = vector.shape_cast %48 : vector<1x256xf32> to vector<1x1x256xf32>
    %50 = vector.broadcast %49 : vector<1x1x256xf32> to vector<2x16x256xf32>
    %51 = arith.mulf %47, %50 : vector<2x16x256xf32>
    %52 = arith.addf %46, %51 : vector<2x16x256xf32>
    %53 = vector.extract_strided_slice %39 {offsets = [0, 0, 32], sizes = [2, 16, 256], strides = [1, 1, 1]} : vector<2x18x288xf32> to vector<2x16x256xf32>
    %c2 = arith.constant 2 : index
    %c0_17 = arith.constant 0 : index
    %54 = vector.load %arg5[%c2, %c0_17] : memref<9x256xf32, #tpu.memory_space<vmem>>, vector<1x256xf32>
    %55 = vector.shape_cast %54 : vector<1x256xf32> to vector<1x1x256xf32>
    %56 = vector.broadcast %55 : vector<1x1x256xf32> to vector<2x16x256xf32>
    %57 = arith.mulf %53, %56 : vector<2x16x256xf32>
    %58 = arith.addf %52, %57 : vector<2x16x256xf32>
    %59 = vector.extract_strided_slice %39 {offsets = [0, 1, 0], sizes = [2, 16, 256], strides = [1, 1, 1]} : vector<2x18x288xf32> to vector<2x16x256xf32>
    %c3 = arith.constant 3 : index
    %c0_18 = arith.constant 0 : index
    %60 = vector.load %arg5[%c3, %c0_18] : memref<9x256xf32, #tpu.memory_space<vmem>>, vector<1x256xf32>
    %61 = vector.shape_cast %60 : vector<1x256xf32> to vector<1x1x256xf32>
    %62 = vector.broadcast %61 : vector<1x1x256xf32> to vector<2x16x256xf32>
    %63 = arith.mulf %59, %62 : vector<2x16x256xf32>
    %64 = arith.addf %58, %63 : vector<2x16x256xf32>
    %65 = vector.extract_strided_slice %39 {offsets = [0, 1, 16], sizes = [2, 16, 256], strides = [1, 1, 1]} : vector<2x18x288xf32> to vector<2x16x256xf32>
    %c4 = arith.constant 4 : index
    %c0_19 = arith.constant 0 : index
    %66 = vector.load %arg5[%c4, %c0_19] : memref<9x256xf32, #tpu.memory_space<vmem>>, vector<1x256xf32>
    %67 = vector.shape_cast %66 : vector<1x256xf32> to vector<1x1x256xf32>
    %68 = vector.broadcast %67 : vector<1x1x256xf32> to vector<2x16x256xf32>
    %69 = arith.mulf %65, %68 : vector<2x16x256xf32>
    %70 = arith.addf %64, %69 : vector<2x16x256xf32>
    %71 = vector.extract_strided_slice %39 {offsets = [0, 1, 32], sizes = [2, 16, 256], strides = [1, 1, 1]} : vector<2x18x288xf32> to vector<2x16x256xf32>
    %c5 = arith.constant 5 : index
    %c0_20 = arith.constant 0 : index
    %72 = vector.load %arg5[%c5, %c0_20] : memref<9x256xf32, #tpu.memory_space<vmem>>, vector<1x256xf32>
    %73 = vector.shape_cast %72 : vector<1x256xf32> to vector<1x1x256xf32>
    %74 = vector.broadcast %73 : vector<1x1x256xf32> to vector<2x16x256xf32>
    %75 = arith.mulf %71, %74 : vector<2x16x256xf32>
    %76 = arith.addf %70, %75 : vector<2x16x256xf32>
    %77 = vector.extract_strided_slice %39 {offsets = [0, 2, 0], sizes = [2, 16, 256], strides = [1, 1, 1]} : vector<2x18x288xf32> to vector<2x16x256xf32>
    %c6 = arith.constant 6 : index
    %c0_21 = arith.constant 0 : index
    %78 = vector.load %arg5[%c6, %c0_21] : memref<9x256xf32, #tpu.memory_space<vmem>>, vector<1x256xf32>
    %79 = vector.shape_cast %78 : vector<1x256xf32> to vector<1x1x256xf32>
    %80 = vector.broadcast %79 : vector<1x1x256xf32> to vector<2x16x256xf32>
    %81 = arith.mulf %77, %80 : vector<2x16x256xf32>
    %82 = arith.addf %76, %81 : vector<2x16x256xf32>
    %83 = vector.extract_strided_slice %39 {offsets = [0, 2, 16], sizes = [2, 16, 256], strides = [1, 1, 1]} : vector<2x18x288xf32> to vector<2x16x256xf32>
    %c7 = arith.constant 7 : index
    %c0_22 = arith.constant 0 : index
    %84 = vector.load %arg5[%c7, %c0_22] : memref<9x256xf32, #tpu.memory_space<vmem>>, vector<1x256xf32>
    %85 = vector.shape_cast %84 : vector<1x256xf32> to vector<1x1x256xf32>
    %86 = vector.broadcast %85 : vector<1x1x256xf32> to vector<2x16x256xf32>
    %87 = arith.mulf %83, %86 : vector<2x16x256xf32>
    %88 = arith.addf %82, %87 : vector<2x16x256xf32>
    %89 = vector.extract_strided_slice %39 {offsets = [0, 2, 32], sizes = [2, 16, 256], strides = [1, 1, 1]} : vector<2x18x288xf32> to vector<2x16x256xf32>
    %c8 = arith.constant 8 : index
    %c0_23 = arith.constant 0 : index
    %90 = vector.load %arg5[%c8, %c0_23] : memref<9x256xf32, #tpu.memory_space<vmem>>, vector<1x256xf32>
    %91 = vector.shape_cast %90 : vector<1x256xf32> to vector<1x1x256xf32>
    %92 = vector.broadcast %91 : vector<1x1x256xf32> to vector<2x16x256xf32>
    %93 = arith.mulf %89, %92 : vector<2x16x256xf32>
    %94 = arith.addf %88, %93 : vector<2x16x256xf32>
    %c0_24 = arith.constant 0 : index
    %c0_25 = arith.constant 0 : index
    %95 = vector.load %arg6[%c0_24, %c0_25] : memref<1x256xf32, #tpu.memory_space<vmem>>, vector<1x256xf32>
    %96 = vector.shape_cast %95 : vector<1x256xf32> to vector<1x1x256xf32>
    %97 = vector.broadcast %96 : vector<1x1x256xf32> to vector<2x16x256xf32>
    %98 = arith.mulf %94, %97 : vector<2x16x256xf32>
    %c0_26 = arith.constant 0 : index
    %c0_27 = arith.constant 0 : index
    %99 = vector.load %arg7[%c0_26, %c0_27] : memref<1x256xf32, #tpu.memory_space<vmem>>, vector<1x256xf32>
    %100 = vector.shape_cast %99 : vector<1x256xf32> to vector<1x1x256xf32>
    %101 = vector.broadcast %100 : vector<1x1x256xf32> to vector<2x16x256xf32>
    %102 = arith.addf %98, %101 : vector<2x16x256xf32>
    %cst_28 = arith.constant dense<0.000000e+00> : vector<2x256xf32>
    %103 = vector.multi_reduction <add>, %102, %cst_28 [1] : vector<2x16x256xf32> to vector<2x256xf32>
    %c0_29 = arith.constant 0 : index
    %c0_30 = arith.constant 0 : index
    %104 = vector.load %arg8[%c0_29, %c0_30] : memref<256x16xf32, #tpu.memory_space<vmem>>, vector<256x16xf32>
    %cst_31 = arith.constant dense<0.000000e+00> : vector<2x16xf32>
    %105 = tpu.matmul %103, %104, %cst_31 {dimension_numbers = #tpu.dot_dimension_numbers<[1], [0], [0], [1], [0, 0, 1, 1], [], []>} : vector<2x256xf32>, vector<256x16xf32>, vector<2x16xf32> -> vector<2x16xf32>
    %c0_32 = arith.constant 0 : index
    %c0_33 = arith.constant 0 : index
    %106 = vector.load %arg9[%c0_32, %c0_33] : memref<16x4xf32, #tpu.memory_space<vmem>>, vector<16x4xf32>
    %cst_34 = arith.constant dense<0.000000e+00> : vector<2x4xf32>
    %107 = tpu.matmul %105, %106, %cst_34 {dimension_numbers = #tpu.dot_dimension_numbers<[1], [0], [0], [1], [0, 0, 1, 1], [], []>} : vector<2x16xf32>, vector<16x4xf32>, vector<2x4xf32> -> vector<2x4xf32>
    %cst_35 = arith.constant 0.000000e+00 : f32
    %108 = vector.broadcast %cst_35 : f32 to vector<2x4xf32>
    %109 = arith.maximumf %107, %108 : vector<2x4xf32>
    %c0_36 = arith.constant 0 : index
    %c0_37 = arith.constant 0 : index
    %110 = vector.load %arg10[%c0_36, %c0_37] : memref<4x256xf32, #tpu.memory_space<vmem>>, vector<4x256xf32>
    %cst_38 = arith.constant dense<0.000000e+00> : vector<2x256xf32>
    %111 = tpu.matmul %109, %110, %cst_38 {dimension_numbers = #tpu.dot_dimension_numbers<[1], [0], [0], [1], [0, 0, 1, 1], [], []>} : vector<2x4xf32>, vector<4x256xf32>, vector<2x256xf32> -> vector<2x256xf32>
    %cst_39 = arith.constant 3.000000e+00 : f32
    %112 = vector.broadcast %cst_39 : f32 to vector<2x256xf32>
    %113 = arith.addf %111, %112 : vector<2x256xf32>
    %cst_40 = arith.constant 0.000000e+00 : f32
    %cst_41 = arith.constant 6.000000e+00 : f32
    %114 = vector.broadcast %cst_40 : f32 to vector<2x256xf32>
    %115 = arith.maximumf %114, %113 : vector<2x256xf32>
    %116 = vector.broadcast %cst_41 : f32 to vector<2x256xf32>
    %117 = arith.minimumf %116, %115 : vector<2x256xf32>
    %cst_42 = arith.constant 0.166666672 : f32
    %118 = vector.broadcast %cst_42 : f32 to vector<2x256xf32>
    %119 = arith.mulf %117, %118 : vector<2x256xf32>
    %120 = vector.shape_cast %119 : vector<2x256xf32> to vector<2x1x256xf32>
    %121 = vector.broadcast %120 : vector<2x1x256xf32> to vector<2x16x256xf32>
    %122 = arith.mulf %102, %121 : vector<2x16x256xf32>
    %cst_43 = arith.constant 3.000000e+00 : f32
    %123 = vector.broadcast %cst_43 : f32 to vector<2x16x256xf32>
    %124 = arith.addf %122, %123 : vector<2x16x256xf32>
    %cst_44 = arith.constant 0.000000e+00 : f32
    %cst_45 = arith.constant 6.000000e+00 : f32
    %125 = vector.broadcast %cst_44 : f32 to vector<2x16x256xf32>
    %126 = arith.maximumf %125, %124 : vector<2x16x256xf32>
    %127 = vector.broadcast %cst_45 : f32 to vector<2x16x256xf32>
    %128 = arith.minimumf %127, %126 : vector<2x16x256xf32>
    %129 = arith.mulf %122, %128 : vector<2x16x256xf32>
    %cst_46 = arith.constant 0.166666672 : f32
    %130 = vector.broadcast %cst_46 : f32 to vector<2x16x256xf32>
    %131 = arith.mulf %129, %130 : vector<2x16x256xf32>
    %132 = vector.shape_cast %131 : vector<2x16x256xf32> to vector<32x256xf32>
    %c0_47 = arith.constant 0 : index
    %c0_48 = arith.constant 0 : index
    %133 = vector.load %arg11[%c0_47, %c0_48] : memref<256x128xf32, #tpu.memory_space<vmem>>, vector<256x128xf32>
    %cst_49 = arith.constant dense<0.000000e+00> : vector<32x128xf32>
    %134 = tpu.matmul %132, %133, %cst_49 {dimension_numbers = #tpu.dot_dimension_numbers<[1], [0], [0], [1], [0, 0, 1, 1], [], []>} : vector<32x256xf32>, vector<256x128xf32>, vector<32x128xf32> -> vector<32x128xf32>
    %c0_50 = arith.constant 0 : index
    %c0_51 = arith.constant 0 : index
    %135 = vector.load %arg12[%c0_50, %c0_51] : memref<1x128xf32, #tpu.memory_space<vmem>>, vector<1x128xf32>
    %136 = vector.broadcast %135 : vector<1x128xf32> to vector<32x128xf32>
    %137 = arith.mulf %134, %136 : vector<32x128xf32>
    %c0_52 = arith.constant 0 : index
    %c0_53 = arith.constant 0 : index
    %138 = vector.load %arg13[%c0_52, %c0_53] : memref<1x128xf32, #tpu.memory_space<vmem>>, vector<1x128xf32>
    %139 = vector.broadcast %138 : vector<1x128xf32> to vector<32x128xf32>
    %140 = arith.addf %137, %139 : vector<32x128xf32>
    %141 = vector.shape_cast %140 : vector<32x128xf32> to vector<2x16x128xf32>
    %142 = vector.extract_strided_slice %0 {offsets = [0, 1, 8], sizes = [2, 16, 128], strides = [1, 1, 1]} : vector<2x18x144xf32> to vector<2x16x128xf32>
    %143 = arith.addf %141, %142 : vector<2x16x128xf32>
    %c0_54 = arith.constant 0 : index
    %c0_55 = arith.constant 0 : index
    %c0_56 = arith.constant 0 : index
    %144 = vector.load %arg14[%c0_54, %c0_55, %c0_56] : memref<2x16x128xf32, #tpu.memory_space<vmem>>, vector<2x16x128xf32>
    tpu.vector_store %arg14[%c0_54, %c0_55, %c0_56], %143 {strides = array<i32>} : memref<2x16x128xf32, #tpu.memory_space<vmem>>, vector<2x16x128xf32>,
    return
  }
  func.func @transform_0(%arg0: i32) -> (i32, i32, i32) {
    %c0_i32 = arith.constant 0 : i32
    %c0_i32_0 = arith.constant 0 : i32
    %c0_i32_1 = arith.constant 0 : i32
    return %arg0, %c0_i32, %c0_i32_0 : i32, i32, i32
  }
  func.func @transform_1(%arg0: i32) -> (i32, i32) {
    %c0_i32 = arith.constant 0 : i32
    %c0_i32_0 = arith.constant 0 : i32
    %c0_i32_1 = arith.constant 0 : i32
    return %c0_i32, %c0_i32_0 : i32, i32
  }
  func.func @transform_2(%arg0: i32) -> (i32, i32) {
    %c0_i32 = arith.constant 0 : i32
    %c0_i32_0 = arith.constant 0 : i32
    %c0_i32_1 = arith.constant 0 : i32
    return %c0_i32, %c0_i32_0 : i32, i32
  }
  func.func @transform_3(%arg0: i32) -> (i32, i32) {
    %c0_i32 = arith.constant 0 : i32
    %c0_i32_0 = arith.constant 0 : i32
    %c0_i32_1 = arith.constant 0 : i32
    return %c0_i32, %c0_i32_0 : i32, i32
  }
  func.func @transform_4(%arg0: i32) -> (i32, i32) {
    %c0_i32 = arith.constant 0 : i32
    %c0_i32_0 = arith.constant 0 : i32
    %c0_i32_1 = arith.constant 0 : i32
    return %c0_i32, %c0_i32_0 : i32, i32
  }
  func.func @transform_5(%arg0: i32) -> (i32, i32) {
    %c0_i32 = arith.constant 0 : i32
    %c0_i32_0 = arith.constant 0 : i32
    %c0_i32_1 = arith.constant 0 : i32
    return %c0_i32, %c0_i32_0 : i32, i32
  }
  func.func @transform_6(%arg0: i32) -> (i32, i32) {
    %c0_i32 = arith.constant 0 : i32
    %c0_i32_0 = arith.constant 0 : i32
    %c0_i32_1 = arith.constant 0 : i32
    return %c0_i32, %c0_i32_0 : i32, i32
  }
  func.func @transform_7(%arg0: i32) -> (i32, i32) {
    %c0_i32 = arith.constant 0 : i32
    %c0_i32_0 = arith.constant 0 : i32
    %c0_i32_1 = arith.constant 0 : i32
    return %c0_i32, %c0_i32_0 : i32, i32
  }
  func.func @transform_8(%arg0: i32) -> (i32, i32) {
    %c0_i32 = arith.constant 0 : i32
    %c0_i32_0 = arith.constant 0 : i32
    %c0_i32_1 = arith.constant 0 : i32
    return %c0_i32, %c0_i32_0 : i32, i32
  }
  func.func @transform_9(%arg0: i32) -> (i32, i32) {
    %c0_i32 = arith.constant 0 : i32
    %c0_i32_0 = arith.constant 0 : i32
    %c0_i32_1 = arith.constant 0 : i32
    return %c0_i32, %c0_i32_0 : i32, i32
  }
  func.func @transform_10(%arg0: i32) -> (i32, i32) {
    %c0_i32 = arith.constant 0 : i32
    %c0_i32_0 = arith.constant 0 : i32
    %c0_i32_1 = arith.constant 0 : i32
    return %c0_i32, %c0_i32_0 : i32, i32
  }
  func.func @transform_11(%arg0: i32) -> (i32, i32) {
    %c0_i32 = arith.constant 0 : i32
    %c0_i32_0 = arith.constant 0 : i32
    %c0_i32_1 = arith.constant 0 : i32
    return %c0_i32, %c0_i32_0 : i32, i32
  }
  func.func @transform_12(%arg0: i32) -> (i32, i32) {
    %c0_i32 = arith.constant 0 : i32
    %c0_i32_0 = arith.constant 0 : i32
    %c0_i32_1 = arith.constant 0 : i32
    return %c0_i32, %c0_i32_0 : i32, i32
  }
  func.func @transform_13(%arg0: i32) -> (i32, i32, i32) {
    %c0_i32 = arith.constant 0 : i32
    %c0_i32_0 = arith.constant 0 : i32
    %c0_i32_1 = arith.constant 0 : i32
    return %arg0, %c0_i32, %c0_i32_0 : i32, i32, i32
  }
}

</mosaic_0001>

<llo_original>
// kernel: tile.69
$region0: #{tile.69}
  %s0 = inlined_call_operand.vmem [shape: f32[3,1,3,16,16], index: 0, kind: input, shape index: {}]
  %s1 = inlined_call_operand.vmem [shape: f32[9,256], index: 1, kind: output, shape index: {}]
  %v2 = vld [vmem:[%s0] ss:$8 sm:$0xf]
  %v3 = vld [vmem:[%s0] ss:$8 sm:$0xf0]
  %vm4 = vcmask 1047556
  %v5 = vsel %vm4, %v3, %v2
  %vm6 = vcmask 130048
  %7 = vst.msk [vmem:[%s1] ss:$8 sm:$0x3] %vm6, %v5
  %s8 = scalar_lea.vmem %s1, 4294967281
  %9 = vst.msk [vmem:[%s8] ss:$8 sm:$0xc] %vm6, %v5
  %s10 = scalar_lea.vmem %s1, 4294967266
  %11 = vst.msk [vmem:[%s10] ss:$8 sm:$0x30] %vm6, %v5
  %s12 = scalar_lea.vmem %s1, 4294967251
  %13 = vst.msk [vmem:[%s12] ss:$8 sm:$0xc0] %vm6, %v5
  %s14 = scalar_lea.vmem %s0, 64
  %v15 = vld [vmem:[%s14] ss:$8 sm:$0xf]
  %s16 = scalar_lea.vmem %s0, 64
  %v17 = vld [vmem:[%s16] ss:$8 sm:$0xf0]
  %vm18 = vcmask 1047556
  %v19 = vsel %vm18, %v17, %v15
  %vm20 = vcmask 130048
  %s21 = scalar_lea.vmem %s1, 4
  %22 = vst.msk [vmem:[%s21] ss:$8 sm:$0x3] %vm20, %v19
  %s23 = scalar_lea.vmem %s1, 4294967285
  %24 = vst.msk [vmem:[%s23] ss:$8 sm:$0xc] %vm20, %v19
  %s25 = scalar_lea.vmem %s1, 4294967270
  %26 = vst.msk [vmem:[%s25] ss:$8 sm:$0x30] %vm20, %v19
  %s27 = scalar_lea.vmem %s1, 4294967255
  %28 = vst.msk [vmem:[%s27] ss:$8 sm:$0xc0] %vm20, %v19
  %s29 = scalar_lea.vmem %s0, 128
  %s30 = smov 3
  %v31 = vld [vmem:[%s29] ss:$8 sm:%s30]
  %vm32 = vcmask 130048
  %s33 = scalar_lea.vmem %s1, 16
  %34 = vst.msk [vmem:[%s33] ss:$8 sm:$0x3] %vm32, %v31
  %s35 = scalar_lea.vmem %s0, 7
  %s36 = smov 3
  %v37 = vld [vmem:[%s35] ss:$16 sm:%s36]
  %s38 = scalar_lea.vmem %s0, 7
  %s39 = smov 12
  %v40 = vld [vmem:[%s38] ss:$16 sm:%s39]
  %vm41 = vcmask 1043458
  %v42 = vsel %vm41, %v40, %v37
  %s43 = scalar_lea.vmem %s0, 7
  %s44 = smov 48
  %v45 = vld [vmem:[%s43] ss:$16 sm:%s44]
  %vm46 = vcmask 1045508
  %v47 = vsel %vm46, %v45, %v42
  %s48 = scalar_lea.vmem %s0, 7
  %s49 = smov 192
  %v50 = vld [vmem:[%s48] ss:$16 sm:%s49]
  %vm51 = vcmask 1047558
  %v52 = vsel %vm51, %v50, %v47
  %53 = vrot.lane.b32.xlu0 %v52, 112
  %v54 = vpop.permute.xlu0 %53
  %vm55 = vcmask 1048448
  %56 = vst.msk [vmem:[%s1] sm:$0xff] %vm55, %v54
  %s57 = scalar_lea.vmem %s0, 15
  %s58 = smov 3
  %v59 = vld [vmem:[%s57] ss:$16 sm:%s58]
  %s60 = scalar_lea.vmem %s0, 15
  %s61 = smov 12
  %v62 = vld [vmem:[%s60] ss:$16 sm:%s61]
  %vm63 = vcmask 1043458
  %v64 = vsel %vm63, %v62, %v59
  %s65 = scalar_lea.vmem %s0, 15
  %s66 = smov 48
  %v67 = vld [vmem:[%s65] ss:$16 sm:%s66]
  %vm68 = vcmask 1045508
  %v69 = vsel %vm68, %v67, %v64
  %s70 = scalar_lea.vmem %s0, 15
  %s71 = smov 192
  %v72 = vld [vmem:[%s70] ss:$16 sm:%s71]
  %vm73 = vcmask 1047558
  %v74 = vsel %vm73, %v72, %v69
  %75 = vrot.lane.b32.xlu0 %v74, 112
  %v76 = vpop.permute.xlu0 %75
  %vm77 = vcmask 1048448
  %s78 = scalar_lea.vmem %s1, 8
  %79 = vst.msk [vmem:[%s78] sm:$0xff] %vm77, %v76
  %s80 = scalar_lea.vmem %s0, 135
  %s81 = smov 3
  %v82 = vld [vmem:[%s80] ss:$8 sm:%s81]
  %83 = vrot.lane.b32.xlu0 %v82, 112
  %v84 = vpop.permute.xlu0 %83
  %vm85 = vcmask 1048448
  %s86 = scalar_lea.vmem %s1, 16
  %87 = vst.msk [vmem:[%s86] ss:$8 sm:$0x3] %vm85, %v84
  %s88 = scalar_lea.vmem %s0, 6
  %s89 = smov 3
  %v90 = vld [vmem:[%s88] ss:$16 sm:%s89]
  %s91 = scalar_lea.vmem %s0, 6
  %s92 = smov 12
  %v93 = vld [vmem:[%s91] ss:$16 sm:%s92]
  %vm94 = vcmask 1043458
  %v95 = vsel %vm94, %v93, %v90
  %s96 = scalar_lea.vmem %s0, 6
  %s97 = smov 48
  %v98 = vld [vmem:[%s96] ss:$16 sm:%s97]
  %vm99 = vcmask 1045508
  %v100 = vsel %vm99, %v98, %v95
  %s101 = scalar_lea.vmem %s0, 6
  %s102 = smov 192
  %v103 = vld [vmem:[%s101] ss:$16 sm:%s102]
  %vm104 = vcmask 1047558
  %v105 = vsel %vm104, %v103, %v100
  %106 = vrot.lane.b32.xlu0 %v105, 96
  %v107 = vpop.permute.xlu0 %106
  %vm108 = vcmask 917248
  %109 = vst.msk [vmem:[%s1] sm:$0xff] %vm108, %v107
  %s110 = scalar_lea.vmem %s0, 14
  %s111 = smov 3
  %v112 = vld [vmem:[%s110] ss:$16 sm:%s111]
  %s113 = scalar_lea.vmem %s0, 14
  %s114 = smov 12
  %v115 = vld [vmem:[%s113] ss:$16 sm:%s114]
  %vm116 = vcmask 1043458
  %v117 = vsel %vm116, %v115, %v112
  %s118 = scalar_lea.vmem %s0, 14
  %s119 = smov 48
  %v120 = vld [vmem:[%s118] ss:$16 sm:%s119]
  %vm121 = vcmask 1045508
  %v122 = vsel %vm121, %v120, %v117
  %s123 = scalar_lea.vmem %s0, 14
  %s124 = smov 192
  %v125 = vld [vmem:[%s123] ss:$16 sm:%s124]
  %vm126 = vcmask 1047558
  %v127 = vsel %vm126, %v125, %v122
  %128 = vrot.lane.b32.xlu0 %v127, 96
  %v129 = vpop.permute.xlu0 %128
  %vm130 = vcmask 917248
  %s131 = scalar_lea.vmem %s1, 8
  %132 = vst.msk [vmem:[%s131] sm:$0xff] %vm130, %v129
  %s133 = scalar_lea.vmem %s0, 134
  %s134 = smov 3
  %v135 = vld [vmem:[%s133] ss:$8 sm:%s134]
  %136 = vrot.lane.b32.xlu0 %v135, 96
  %v137 = vpop.permute.xlu0 %136
  %vm138 = vcmask 917248
  %s139 = scalar_lea.vmem %s1, 16
  %140 = vst.msk [vmem:[%s139] ss:$8 sm:$0x3] %vm138, %v137
  %s141 = scalar_lea.vmem %s0, 5
  %s142 = smov 3
  %v143 = vld [vmem:[%s141] ss:$16 sm:%s142]
  %s144 = scalar_lea.vmem %s0, 5
  %s145 = smov 12
  %v146 = vld [vmem:[%s144] ss:$16 sm:%s145]
  %vm147 = vcmask 1043458
  %v148 = vsel %vm147, %v146, %v143
  %s149 = scalar_lea.vmem %s0, 5
  %s150 = smov 48
  %v151 = vld [vmem:[%s149] ss:$16 sm:%s150]
  %vm152 = vcmask 1045508
  %v153 = vsel %vm152, %v151, %v148
  %s154 = scalar_lea.vmem %s0, 5
  %s155 = smov 192
  %v156 = vld [vmem:[%s154] ss:$16 sm:%s155]
  %vm157 = vcmask 1047558
  %v158 = vsel %vm157, %v156, %v153
  %159 = vrot.lane.b32.xlu0 %v158, 80
  %v160 = vpop.permute.xlu0 %159
  %vm161 = vcmask 786048
  %162 = vst.msk [vmem:[%s1] sm:$0xff] %vm161, %v160
  %s163 = scalar_lea.vmem %s0, 13
  %s164 = smov 3
  %v165 = vld [vmem:[%s163] ss:$16 sm:%s164]
  %s166 = scalar_lea.vmem %s0, 13
  %s167 = smov 12
  %v168 = vld [vmem:[%s166] ss:$16 sm:%s167]
  %vm169 = vcmask 1043458
  %v170 = vsel %vm169, %v168, %v165
  %s171 = scalar_lea.vmem %s0, 13
  %s172 = smov 48
  %v173 = vld [vmem:[%s171] ss:$16 sm:%s172]
  %vm174 = vcmask 1045508
  %v175 = vsel %vm174, %v173, %v170
  %s176 = scalar_lea.vmem %s0, 13
  %s177 = smov 192
  %v178 = vld [vmem:[%s176] ss:$16 sm:%s177]
  %vm179 = vcmask 1047558
  %v180 = vsel %vm179, %v178, %v175
  %181 = vrot.lane.b32.xlu0 %v180, 80
  %v182 = vpop.permute.xlu0 %181
  %vm183 = vcmask 786048
  %s184 = scalar_lea.vmem %s1, 8
  %185 = vst.msk [vmem:[%s184] sm:$0xff] %vm183, %v182
  %s186 = scalar_lea.vmem %s0, 133
  %s187 = smov 3
  %v188 = vld [vmem:[%s186] ss:$8 sm:%s187]
  %189 = vrot.lane.b32.xlu0 %v188, 80
  %v190 = vpop.permute.xlu0 %189
  %vm191 = vcmask 786048
  %s192 = scalar_lea.vmem %s1, 16
  %193 = vst.msk [vmem:[%s192] ss:$8 sm:$0x3] %vm191, %v190
  %s194 = scalar_lea.vmem %s0, 4
  %s195 = smov 3
  %v196 = vld [vmem:[%s194] ss:$16 sm:%s195]
  %s197 = scalar_lea.vmem %s0, 4
  %s198 = smov 12
  %v199 = vld [vmem:[%s197] ss:$16 sm:%s198]
  %vm200 = vcmask 1043458
  %v201 = vsel %vm200, %v199, %v196
  %s202 = scalar_lea.vmem %s0, 4
  %s203 = smov 48
  %v204 = vld [vmem:[%s202] ss:$16 sm:%s203]
  %vm205 = vcmask 1045508
  %v206 = vsel %vm205, %v204, %v201
  %s207 = scalar_lea.vmem %s0, 4
  %s208 = smov 192
  %v209 = vld [vmem:[%s207] ss:$16 sm:%s208]
  %vm210 = vcmask 1047558
  %v211 = vsel %vm210, %v209, %v206
  %212 = vrot.lane.b32.xlu0 %v211, 64
  %v213 = vpop.permute.xlu0 %212
  %vm214 = vcmask 654848
  %215 = vst.msk [vmem:[%s1] sm:$0xff] %vm214, %v213
  %s216 = scalar_lea.vmem %s0, 12
  %s217 = smov 3
  %v218 = vld [vmem:[%s216] ss:$16 sm:%s217]
  %s219 = scalar_lea.vmem %s0, 12
  %s220 = smov 12
  %v221 = vld [vmem:[%s219] ss:$16 sm:%s220]
  %vm222 = vcmask 1043458
  %v223 = vsel %vm222, %v221, %v218
  %s224 = scalar_lea.vmem %s0, 12
  %s225 = smov 48
  %v226 = vld [vmem:[%s224] ss:$16 sm:%s225]
  %vm227 = vcmask 1045508
  %v228 = vsel %vm227, %v226, %v223
  %s229 = scalar_lea.vmem %s0, 12
  %s230 = smov 192
  %v231 = vld [vmem:[%s229] ss:$16 sm:%s230]
  %vm232 = vcmask 1047558
  %v233 = vsel %vm232, %v231, %v228
  %234 = vrot.lane.b32.xlu0 %v233, 64
  %v235 = vpop.permute.xlu0 %234
  %vm236 = vcmask 654848
  %s237 = scalar_lea.vmem %s1, 8
  %238 = vst.msk [vmem:[%s237] sm:$0xff] %vm236, %v235
  %s239 = scalar_lea.vmem %s0, 132
  %s240 = smov 3
  %v241 = vld [vmem:[%s239] ss:$8 sm:%s240]
  %242 = vrot.lane.b32.xlu0 %v241, 64
  %v243 = vpop.permute.xlu0 %242
  %vm244 = vcmask 654848
  %s245 = scalar_lea.vmem %s1, 16
  %246 = vst.msk [vmem:[%s245] ss:$8 sm:$0x3] %vm244, %v243
  %s247 = scalar_lea.vmem %s0, 3
  %s248 = smov 3
  %v249 = vld [vmem:[%s247] ss:$16 sm:%s248]
  %s250 = scalar_lea.vmem %s0, 3
  %s251 = smov 12
  %v252 = vld [vmem:[%s250] ss:$16 sm:%s251]
  %vm253 = vcmask 1043458
  %v254 = vsel %vm253, %v252, %v249
  %s255 = scalar_lea.vmem %s0, 3
  %s256 = smov 48
  %v257 = vld [vmem:[%s255] ss:$16 sm:%s256]
  %vm258 = vcmask 1045508
  %v259 = vsel %vm258, %v257, %v254
  %s260 = scalar_lea.vmem %s0, 3
  %s261 = smov 192
  %v262 = vld [vmem:[%s260] ss:$16 sm:%s261]
  %vm263 = vcmask 1047558
  %v264 = vsel %vm263, %v262, %v259
  %265 = vrot.lane.b32.xlu0 %v264, 48
  %v266 = vpop.permute.xlu0 %265
  %vm267 = vcmask 523648
  %268 = vst.msk [vmem:[%s1] sm:$0xff] %vm267, %v266
  %s269 = scalar_lea.vmem %s0, 11
  %s270 = smov 3
  %v271 = vld [vmem:[%s269] ss:$16 sm:%s270]
  %s272 = scalar_lea.vmem %s0, 11
  %s273 = smov 12
  %v274 = vld [vmem:[%s272] ss:$16 sm:%s273]
  %vm275 = vcmask 1043458
  %v276 = vsel %vm275, %v274, %v271
  %s277 = scalar_lea.vmem %s0, 11
  %s278 = smov 48
  %v279 = vld [vmem:[%s277] ss:$16 sm:%s278]
  %vm280 = vcmask 1045508
  %v281 = vsel %vm280, %v279, %v276
  %s282 = scalar_lea.vmem %s0, 11
  %s283 = smov 192
  %v284 = vld [vmem:[%s282] ss:$16 sm:%s283]
  %vm285 = vcmask 1047558
  %v286 = vsel %vm285, %v284, %v281
  %287 = vrot.lane.b32.xlu0 %v286, 48
  %v288 = vpop.permute.xlu0 %287
  %vm289 = vcmask 523648
  %s290 = scalar_lea.vmem %s1, 8
  %291 = vst.msk [vmem:[%s290] sm:$0xff] %vm289, %v288
  %s292 = scalar_lea.vmem %s0, 131
  %s293 = smov 3
  %v294 = vld [vmem:[%s292] ss:$8 sm:%s293]
  %295 = vrot.lane.b32.xlu0 %v294, 48
  %v296 = vpop.permute.xlu0 %295
  %vm297 = vcmask 523648
  %s298 = scalar_lea.vmem %s1, 16
  %299 = vst.msk [vmem:[%s298] ss:$8 sm:$0x3] %vm297, %v296
  %s300 = scalar_lea.vmem %s0, 2
  %s301 = smov 3
  %v302 = vld [vmem:[%s300] ss:$16 sm:%s301]
  %s303 = scalar_lea.vmem %s0, 2
  %s304 = smov 12
  %v305 = vld [vmem:[%s303] ss:$16 sm:%s304]
  %vm306 = vcmask 1043458
  %v307 = vsel %vm306, %v305, %v302
  %s308 = scalar_lea.vmem %s0, 2
  %s309 = smov 48
  %v310 = vld [vmem:[%s308] ss:$16 sm:%s309]
  %vm311 = vcmask 1045508
  %v312 = vsel %vm311, %v310, %v307
  %s313 = scalar_lea.vmem %s0, 2
  %s314 = smov 192
  %v315 = vld [vmem:[%s313] ss:$16 sm:%s314]
  %vm316 = vcmask 1047558
  %v317 = vsel %vm316, %v315, %v312
  %318 = vrot.lane.b32.xlu0 %v317, 32
  %v319 = vpop.permute.xlu0 %318
  %vm320 = vcmask 392448
  %321 = vst.msk [vmem:[%s1] sm:$0xff] %vm320, %v319
  %s322 = scalar_lea.vmem %s0, 10
  %s323 = smov 3
  %v324 = vld [vmem:[%s322] ss:$16 sm:%s323]
  %s325 = scalar_lea.vmem %s0, 10
  %s326 = smov 12
  %v327 = vld [vmem:[%s325] ss:$16 sm:%s326]
  %vm328 = vcmask 1043458
  %v329 = vsel %vm328, %v327, %v324
  %s330 = scalar_lea.vmem %s0, 10
  %s331 = smov 48
  %v332 = vld [vmem:[%s330] ss:$16 sm:%s331]
  %vm333 = vcmask 1045508
  %v334 = vsel %vm333, %v332, %v329
  %s335 = scalar_lea.vmem %s0, 10
  %s336 = smov 192
  %v337 = vld [vmem:[%s335] ss:$16 sm:%s336]
  %vm338 = vcmask 1047558
  %v339 = vsel %vm338, %v337, %v334
  %340 = vrot.lane.b32.xlu0 %v339, 32
  %v341 = vpop.permute.xlu0 %340
  %vm342 = vcmask 392448
  %s343 = scalar_lea.vmem %s1, 8
  %344 = vst.msk [vmem:[%s343] sm:$0xff] %vm342, %v341
  %s345 = scalar_lea.vmem %s0, 130
  %s346 = smov 3
  %v347 = vld [vmem:[%s345] ss:$8 sm:%s346]
  %348 = vrot.lane.b32.xlu0 %v347, 32
  %v349 = vpop.permute.xlu0 %348
  %vm350 = vcmask 392448
  %s351 = scalar_lea.vmem %s1, 16
  %352 = vst.msk [vmem:[%s351] ss:$8 sm:$0x3] %vm350, %v349
  %s353 = scalar_lea.vmem %s0, 1
  %s354 = smov 3
  %v355 = vld [vmem:[%s353] ss:$16 sm:%s354]
  %s356 = scalar_lea.vmem %s0, 1
  %s357 = smov 12
  %v358 = vld [vmem:[%s356] ss:$16 sm:%s357]
  %vm359 = vcmask 1043458
  %v360 = vsel %vm359, %v358, %v355
  %s361 = scalar_lea.vmem %s0, 1
  %s362 = smov 48
  %v363 = vld [vmem:[%s361] ss:$16 sm:%s362]
  %vm364 = vcmask 1045508
  %v365 = vsel %vm364, %v363, %v360
  %s366 = scalar_lea.vmem %s0, 1
  %s367 = smov 192
  %v368 = vld [vmem:[%s366] ss:$16 sm:%s367]
  %vm369 = vcmask 1047558
  %v370 = vsel %vm369, %v368, %v365
  %371 = vrot.lane.b32.xlu0 %v370, 16
  %v372 = vpop.permute.xlu0 %371
  %vm373 = vcmask 261248
  %374 = vst.msk [vmem:[%s1] sm:$0xff] %vm373, %v372
  %s375 = scalar_lea.vmem %s0, 9
  %s376 = smov 3
  %v377 = vld [vmem:[%s375] ss:$16 sm:%s376]
  %s378 = scalar_lea.vmem %s0, 9
  %s379 = smov 12
  %v380 = vld [vmem:[%s378] ss:$16 sm:%s379]
  %vm381 = vcmask 1043458
  %v382 = vsel %vm381, %v380, %v377
  %s383 = scalar_lea.vmem %s0, 9
  %s384 = smov 48
  %v385 = vld [vmem:[%s383] ss:$16 sm:%s384]
  %vm386 = vcmask 1045508
  %v387 = vsel %vm386, %v385, %v382
  %s388 = scalar_lea.vmem %s0, 9
  %s389 = smov 192
  %v390 = vld [vmem:[%s388] ss:$16 sm:%s389]
  %vm391 = vcmask 1047558
  %v392 = vsel %vm391, %v390, %v387
  %393 = vrot.lane.b32.xlu0 %v392, 16
  %v394 = vpop.permute.xlu0 %393
  %vm395 = vcmask 261248
  %s396 = scalar_lea.vmem %s1, 8
  %397 = vst.msk [vmem:[%s396] sm:$0xff] %vm395, %v394
  %s398 = scalar_lea.vmem %s0, 129
  %s399 = smov 3
  %v400 = vld [vmem:[%s398] ss:$8 sm:%s399]
  %401 = vrot.lane.b32.xlu0 %v400, 16
  %v402 = vpop.permute.xlu0 %401
  %vm403 = vcmask 261248
  %s404 = scalar_lea.vmem %s1, 16
  %405 = vst.msk [vmem:[%s404] ss:$8 sm:$0x3] %vm403, %v402

// kernel: mobile_bottleneck_pallas.1
$region0: #{mobile_bottleneck_pallas.1}
  #allocation0 [shape = 'u32[]', space=smem, size = 0x4, offset = 0x4, fixed_abs, tag = 'smem constant byte address 0x4 - core index']
  #allocation1 [shape = 'u32[72,128]{1,0:T(1,128)}', space=vmem, size = 0x9000, scoped, tag = 'internal scratch']
  %s0 = inlined_call_operand.vmem [shape: f32[2,18,144], index: 0, kind: input, shape index: {}]
  %s1 = inlined_call_operand.vmem [shape: f32[144,288], index: 1, kind: input, shape index: {}]
  %s2 = inlined_call_operand.vmem [shape: f32[1,288], index: 2, kind: input, shape index: {}]
  %s3 = inlined_call_operand.vmem [shape: f32[1,288], index: 3, kind: input, shape index: {}]
  %s4 = inlined_call_operand.vmem [shape: f32[9,256], index: 4, kind: input, shape index: {}]
  %s5 = inlined_call_operand.vmem [shape: f32[1,256], index: 5, kind: input, shape index: {}]
  %s6 = inlined_call_operand.vmem [shape: f32[1,256], index: 6, kind: input, shape index: {}]
  %s7 = inlined_call_operand.vmem [shape: f32[256,16], index: 7, kind: input, shape index: {}]
  %s8 = inlined_call_operand.vmem [shape: f32[16,4], index: 8, kind: input, shape index: {}]
  %s9 = inlined_call_operand.vmem [shape: f32[4,256], index: 9, kind: input, shape index: {}]
  %s10 = inlined_call_operand.vmem [shape: f32[256,128], index: 10, kind: input, shape index: {}]
  %s11 = inlined_call_operand.vmem [shape: f32[1,128], index: 11, kind: input, shape index: {}]
  %s12 = inlined_call_operand.vmem [shape: f32[1,128], index: 12, kind: input, shape index: {}]
  %s13 = inlined_call_operand.vmem [shape: f32[2,16,128], index: 13, kind: output, shape index: {}]
  %s14 = sld [smem:[#allocation0]]
  $region62: #{mobile_bottleneck_pallas.1} parent=0
    _
  %s16 = ssub.s32 1, %s14
  %s17 = scalar_select 0, %s16, %s14
  // Predicated region
  $region2: #{mobile_bottleneck_pallas.1} parent=0 // pred_check
    _
  $region3: #{mobile_bottleneck_pallas.1} parent=0 // pred_check_branch
    %19 = sbr.rel (0) target = $region5
  $region4: #{mobile_bottleneck_pallas.1} parent=0 // pred_region
    _
  $region5: #{mobile_bottleneck_pallas.1} parent=0 // pred_fallthru
    _
  // Predicated region
  $region6: #{mobile_bottleneck_pallas.1} parent=0 // pred_check
    _
  $region7: #{mobile_bottleneck_pallas.1} parent=0 // pred_check_branch
    %21 = sbr.rel (0) target = $region9
  $region8: #{mobile_bottleneck_pallas.1} parent=0 // pred_region
    _
  $region9: #{mobile_bottleneck_pallas.1} parent=0 // pred_fallthru
    _
  // Predicated region
  $region10: #{mobile_bottleneck_pallas.1} parent=0 // pred_check
    _
  $region11: #{mobile_bottleneck_pallas.1} parent=0 // pred_check_branch
    %23 = sbr.rel (0) target = $region13
  $region12: #{mobile_bottleneck_pallas.1} parent=0 // pred_region
    _
  $region13: #{mobile_bottleneck_pallas.1} parent=0 // pred_fallthru
    _
  // Predicated region
  $region14: #{mobile_bottleneck_pallas.1} parent=0 // pred_check
    _
  $region15: #{mobile_bottleneck_pallas.1} parent=0 // pred_check_branch
    %25 = sbr.rel (0) target = $region17
  $region16: #{mobile_bottleneck_pallas.1} parent=0 // pred_region
    _
  $region17: #{mobile_bottleneck_pallas.1} parent=0 // pred_fallthru
    _
  // Predicated region
  $region18: #{mobile_bottleneck_pallas.1} parent=0 // pred_check
    _
  $region19: #{mobile_bottleneck_pallas.1} parent=0 // pred_check_branch
    %27 = sbr.rel (0) target = $region21
  $region20: #{mobile_bottleneck_pallas.1} parent=0 // pred_region
    _
  $region21: #{mobile_bottleneck_pallas.1} parent=0 // pred_fallthru
    _
  // Predicated region
  $region22: #{mobile_bottleneck_pallas.1} parent=0 // pred_check
    _
  $region23: #{mobile_bottleneck_pallas.1} parent=0 // pred_check_branch
    %29 = sbr.rel (0) target = $region25
  $region24: #{mobile_bottleneck_pallas.1} parent=0 // pred_region
    _
  $region25: #{mobile_bottleneck_pallas.1} parent=0 // pred_fallthru
    _
  // Predicated region
  $region26: #{mobile_bottleneck_pallas.1} parent=0 // pred_check
    _
  $region27: #{mobile_bottleneck_pallas.1} parent=0 // pred_check_branch
    %31 = sbr.rel (0) target = $region29
  $region28: #{mobile_bottleneck_pallas.1} parent=0 // pred_region
    _
  $region29: #{mobile_bottleneck_pallas.1} parent=0 // pred_fallthru
    _
  // Predicated region
  $region30: #{mobile_bottleneck_pallas.1} parent=0 // pred_check
    _
  $region31: #{mobile_bottleneck_pallas.1} parent=0 // pred_check_branch
    %33 = sbr.rel (0) target = $region33
  $region32: #{mobile_bottleneck_pallas.1} parent=0 // pred_region
    _
  $region33: #{mobile_bottleneck_pallas.1} parent=0 // pred_fallthru
    _
  // Predicated region
  $region34: #{mobile_bottleneck_pallas.1} parent=0 // pred_check
    _
  $region35: #{mobile_bottleneck_pallas.1} parent=0 // pred_check_branch
    %35 = sbr.rel (0) target = $region37
  $region36: #{mobile_bottleneck_pallas.1} parent=0 // pred_region
    _
  $region37: #{mobile_bottleneck_pallas.1} parent=0 // pred_fallthru
    _
  // Predicated region
  $region38: #{mobile_bottleneck_pallas.1} parent=0 // pred_check
    _
  $region39: #{mobile_bottleneck_pallas.1} parent=0 // pred_check_branch
    %37 = sbr.rel (0) target = $region41
  $region40: #{mobile_bottleneck_pallas.1} parent=0 // pred_region
    _
  $region41: #{mobile_bottleneck_pallas.1} parent=0 // pred_fallthru
    _
  // Predicated region
  $region42: #{mobile_bottleneck_pallas.1} parent=0 // pred_check
    _
  $region43: #{mobile_bottleneck_pallas.1} parent=0 // pred_check_branch
    %39 = sbr.rel (0) target = $region45
  $region44: #{mobile_bottleneck_pallas.1} parent=0 // pred_region
    _
  $region45: #{mobile_bottleneck_pallas.1} parent=0 // pred_fallthru
    _
  // Predicated region
  $region46: #{mobile_bottleneck_pallas.1} parent=0 // pred_check
    _
  $region47: #{mobile_bottleneck_pallas.1} parent=0 // pred_check_branch
    %41 = sbr.rel (0) target = $region49
  $region48: #{mobile_bottleneck_pallas.1} parent=0 // pred_region
    _
  $region49: #{mobile_bottleneck_pallas.1} parent=0 // pred_fallthru
    _
  // Predicated region
  $region50: #{mobile_bottleneck_pallas.1} parent=0 // pred_check
    _
  $region51: #{mobile_bottleneck_pallas.1} parent=0 // pred_check_branch
    %43 = sbr.rel (0) target = $region53
  $region52: #{mobile_bottleneck_pallas.1} parent=0 // pred_region
    _
  $region53: #{mobile_bottleneck_pallas.1} parent=0 // pred_fallthru
    _
  %v44 = vld [vmem:[%s0] sm:$0xff]
  %v45 = vld [vmem:[%s0 + $0x8] sm:$0xff]
  %v46 = vld [vmem:[%s0 + $0x10] sm:$0xff]
  %v47 = vld [vmem:[%s0 + $0x18] sm:$0xff]
  %v48 = vld [vmem:[%s0 + $0x20] sm:$0x3]
  %v49 = vld [vmem:[%s0 + $0x28] sm:$0x3]
  %v50 = vld [vmem:[%s0 + $0x30] sm:$0xff]
  %v51 = vld [vmem:[%s0 + $0x38] sm:$0xff]
  %v52 = vld [vmem:[%s0 + $0x40] sm:$0xff]
  %v53 = vld [vmem:[%s0 + $0x48] sm:$0xff]
  %v54 = vld [vmem:[%s0 + $0x50] sm:$0x3]
  %v55 = vld [vmem:[%s0 + $0x58] sm:$0x3]
  %v68 = vrot.slane %v45, 6
  %v69 = vrot.slane %v47, 6
  %v70 = vrot.slane %v49, 6
  %v71 = vrot.slane %v51, 6
  %v72 = vrot.slane %v53, 6
  %v73 = vrot.slane %v55, 6
  %vm74 = vcmask 1041408
  %v75 = vsel %vm74, %v44, %v68
  %vm76 = vcmask 1043458
  %v77 = vsel %vm76, %v44, %v68
  %v78 = vrot.slane %v77, 2
  %vm79 = vcmask 1045508
  %v80 = vsel %vm79, %v44, %v68
  %v81 = vrot.slane %v80, 4
  %vm82 = vcmask 1045504
  %v83 = vsel %vm82, %v68, %v44
  %v84 = vrot.slane %v83, 6
  %v85 = vsel %vm74, %v46, %v69
  %v86 = vsel %vm76, %v46, %v69
  %v87 = vrot.slane %v86, 2
  %v88 = vsel %vm79, %v46, %v69
  %v89 = vrot.slane %v88, 4
  %v90 = vsel %vm82, %v69, %v46
  %v91 = vrot.slane %v90, 6
  %v92 = vsel %vm74, %v48, %v70
  %v93 = vsel %vm74, %v50, %v71
  %v94 = vsel %vm76, %v50, %v71
  %v95 = vrot.slane %v94, 2
  %v96 = vsel %vm79, %v50, %v71
  %v97 = vrot.slane %v96, 4
  %v98 = vsel %vm82, %v71, %v50
  %v99 = vrot.slane %v98, 6
  %v100 = vsel %vm74, %v52, %v72
  %v101 = vsel %vm76, %v52, %v72
  %v102 = vrot.slane %v101, 2
  %v103 = vsel %vm79, %v52, %v72
  %v104 = vrot.slane %v103, 4
  %v105 = vsel %vm82, %v72, %v52
  %v106 = vrot.slane %v105, 6
  %v107 = vsel %vm74, %v54, %v73
  %v108 = vld [vmem:[%s1] sm:$0xff]
  %v109 = vld [vmem:[%s1 + $0x8] sm:$0xff]
  %v110 = vld [vmem:[%s1 + $0x10] sm:$0xff]
  %v111 = vld [vmem:[%s1 + $0x18] sm:$0xff]
  %v112 = vld [vmem:[%s1 + $0x20] sm:$0xff]
  %v113 = vld [vmem:[%s1 + $0x28] sm:$0xff]
  %v114 = vld [vmem:[%s1 + $0x30] sm:$0xff]
  %v115 = vld [vmem:[%s1 + $0x38] sm:$0xff]
  %v116 = vld [vmem:[%s1 + $0x40] sm:$0xff]
  %v117 = vld [vmem:[%s1 + $0x48] sm:$0xff]
  %v118 = vld [vmem:[%s1 + $0x50] sm:$0xff]
  %v119 = vld [vmem:[%s1 + $0x58] sm:$0xff]
  %v120 = vld [vmem:[%s1 + $0x60] sm:$0xff]
  %v121 = vld [vmem:[%s1 + $0x68] sm:$0xff]
  %v122 = vld [vmem:[%s1 + $0x70] sm:$0xff]
  %v123 = vld [vmem:[%s1 + $0x78] sm:$0xff]
  %v124 = vld [vmem:[%s1 + $0x80] sm:$0xff]
  %v125 = vld [vmem:[%s1 + $0x88] sm:$0xff]
  %v126 = vld [vmem:[%s1 + $0x90] sm:$0xff]
  %v127 = vld [vmem:[%s1 + $0x98] sm:$0xff]
  %v128 = vld [vmem:[%s1 + $0xa0] sm:$0xff]
  %v129 = vld [vmem:[%s1 + $0xa8] sm:$0xff]
  %v130 = vld [vmem:[%s1 + $0xb0] sm:$0xff]
  %v131 = vld [vmem:[%s1 + $0xb8] sm:$0xff]
  %v132 = vld [vmem:[%s1 + $0xc0] sm:$0xff]
  %v133 = vld [vmem:[%s1 + $0xc8] sm:$0xff]
  %v134 = vld [vmem:[%s1 + $0xd0] sm:$0xff]
  %v135 = vld [vmem:[%s1 + $0xd8] sm:$0xff]
  %v136 = vld [vmem:[%s1 + $0xe0] sm:$0xff]
  %v137 = vld [vmem:[%s1 + $0xe8] sm:$0xff]
  %v138 = vld [vmem:[%s1 + $0xf0] sm:$0xff]
  %v139 = vld [vmem:[%s1 + $0xf8] sm:$0xff]
  %v140 = vld [vmem:[%s1 + $0x100] sm:$0xff]
  %v141 = vld [vmem:[%s1 + $0x108] sm:$0xff]
  %v142 = vld [vmem:[%s1 + $0x110] sm:$0xff]
  %v143 = vld [vmem:[%s1 + $0x118] sm:$0xff]
  %v144 = vld [vmem:[%s1 + $0x120] sm:$0xff]
  %v145 = vld [vmem:[%s1 + $0x128] sm:$0xff]
  %v146 = vld [vmem:[%s1 + $0x130] sm:$0xff]
  %v147 = vld [vmem:[%s1 + $0x138] sm:$0xff]
  %v148 = vld [vmem:[%s1 + $0x140] sm:$0xff]
  %v149 = vld [vmem:[%s1 + $0x148] sm:$0xff]
  %v150 = vld [vmem:[%s1 + $0x150] sm:$0xff]
  %v151 = vld [vmem:[%s1 + $0x158] sm:$0xff]
  %v152 = vld [vmem:[%s1 + $0x160] sm:$0xff]
  %v153 = vld [vmem:[%s1 + $0x168] sm:$0xff]
  %v154 = vld [vmem:[%s1 + $0x170] sm:$0xff]
  %v155 = vld [vmem:[%s1 + $0x178] sm:$0xff]
  %v156 = vld [vmem:[%s1 + $0x180] sm:$0xff]
  %v157 = vld [vmem:[%s1 + $0x188] sm:$0xff]
  %v158 = vld [vmem:[%s1 + $0x190] sm:$0xff]
  %v159 = vld [vmem:[%s1 + $0x198] sm:$0xff]
  %v160 = vld [vmem:[%s1 + $0x1a0] sm:$0xff]
  %v161 = vld [vmem:[%s1 + $0x1a8] sm:$0xff]
  %162 = vst [vmem:[#allocation1] ss:$4 sm:$0xff] %v75
  %s163 = scalar_lea.vmem [#allocation1], 1
  %164 = vst [vmem:[%s163] ss:$4 sm:$0xff] %v78
  %s165 = scalar_lea.vmem [#allocation1], 2
  %166 = vst [vmem:[%s165] ss:$4 sm:$0xff] %v81
  %s167 = scalar_lea.vmem [#allocation1], 3
  %168 = vst [vmem:[%s167] ss:$4 sm:$0xff] %v84
  %s169 = scalar_lea.vmem [#allocation1], 32
  %170 = vst [vmem:[%s169] ss:$4 sm:$0xff] %v85
  %s171 = scalar_lea.vmem [#allocation1], 33
  %172 = vst [vmem:[%s171] ss:$4 sm:$0xff] %v87
  %s173 = scalar_lea.vmem [#allocation1], 34
  %174 = vst [vmem:[%s173] ss:$4 sm:$0xff] %v89
  %s175 = scalar_lea.vmem [#allocation1], 35
  %176 = vst [vmem:[%s175] ss:$4 sm:$0xff] %v91
  %v177 = vld.sshfl [vmem:[#allocation1] sm:$0xff pattern:$0x73625140]
  %v178 = vld.sshfl [vmem:[#allocation1 + $0x8] sm:$0xff pattern:$0x73625140]
  %v179 = vld.sshfl [vmem:[#allocation1 + $0x20] sm:$0xff pattern:$0x73625140]
  %v180 = vld.sshfl [vmem:[#allocation1 + $0x28] sm:$0xff pattern:$0x73625140]
  %181 = vst [vmem:[#allocation1] ss:$4 sm:$0xff] %v92
  %182 = vst [vmem:[%s163] ss:$4 sm:$0xff] %v93
  %183 = vst [vmem:[%s165] ss:$4 sm:$0xff] %v95
  %184 = vst [vmem:[%s167] ss:$4 sm:$0xff] %v97
  %185 = vst [vmem:[%s169] ss:$4 sm:$0xff] %v99
  %186 = vst [vmem:[%s171] ss:$4 sm:$0xff] %v100
  %187 = vst [vmem:[%s173] ss:$4 sm:$0xff] %v102
  %188 = vst [vmem:[%s175] ss:$4 sm:$0xff] %v104
  %v189 = vld.sshfl [vmem:[#allocation1] sm:$0xff pattern:$0x73625140]
  %v190 = vld.sshfl [vmem:[#allocation1 + $0x8] sm:$0xff pattern:$0x73625140]
  %v191 = vld.sshfl [vmem:[#allocation1 + $0x20] sm:$0xff pattern:$0x73625140]
  %v192 = vld.sshfl [vmem:[#allocation1 + $0x28] sm:$0xff pattern:$0x73625140]
  %193 = vst [vmem:[#allocation1] ss:$4 sm:$0xff] %v106
  %194 = vst [vmem:[%s163] ss:$4 sm:$0xff] %v107
  %v195 = vld.sshfl [vmem:[#allocation1] sm:$0xff pattern:$0x73625140]
  %v196 = vld.sshfl [vmem:[#allocation1 + $0x8] sm:$0xff pattern:$0x73625140]
  %vm202 = vcmask 130048
  %v203 = vsel %vm202, %v178, 0
  %v205 = vsel %vm202, %v180, 0
  %v207 = vsel %vm202, %v190, 0
  %v209 = vsel %vm202, %v192, 0
  %v211 = vsel %vm202, %v196, 0
  %213 = vmatpush.msra.mxu0 %v153
  %214 = vmatpush.msra.mxu0 %v150
  %215 = vmatpush.msra.mxu0 %v147
  %216 = vmatpush.msra.mxu0 %v144
  %217 = vmatpush.msra.mxu0 %v141
  %218 = vmatpush.msra.mxu0 %v138
  %219 = vmatpush.msra.mxu0 %v135
  %220 = vmatpush.msra.mxu0 %v132
  %221 = vmatpush.msra.mxu0 %v129
  %222 = vmatpush.msra.mxu0 %v126
  %223 = vmatpush.msra.mxu0 %v123
  %224 = vmatpush.msra.mxu0 %v120
  %225 = vmatpush.msra.mxu0 %v117
  %226 = vmatpush.msra.mxu0 %v114
  %227 = vmatpush.msra.mxu0 %v111
  %228 = vmatpush.msra.mxu0 %v108
  %229 = vmatmul.f32.gmra.mxu0 %v177
  %v230 = vpop.f32.mrf.mxu0
  %v231 = vadd.f32 0.0, %v230
  %232 = vmatmul.f32.gmra.mxu0 %v179
  %v233 = vpop.f32.mrf.mxu0
  %v234 = vadd.f32 0.0, %v233
  %235 = vmatmul.f32.gmra.mxu0 %v189
  %v236 = vpop.f32.mrf.mxu0
  %v237 = vadd.f32 0.0, %v236
  %238 = vmatmul.f32.gmra.mxu0 %v191
  %v239 = vpop.f32.mrf.mxu0
  %v240 = vadd.f32 0.0, %v239
  %241 = vmatmul.f32.gmra.mxu0 %v195
  %v242 = vpop.f32.mrf.mxu0
  %v243 = vadd.f32 0.0, %v242
  %244 = vdwg.mxu0
  %245 = vmatpush.msra.mxu0 0.0
  %246 = vmatpush.msra.mxu0 0.0
  %247 = vmatpush.msra.mxu0 0.0
  %248 = vmatpush.msra.mxu0 0.0
  %249 = vmatpush.msra.mxu0 0.0
  %250 = vmatpush.msra.mxu0 0.0
  %251 = vmatpush.msra.mxu0 0.0
  %252 = vmatpush.msra.mxu0 0.0
  %253 = vmatpush.msra.mxu0 0.0
  %254 = vmatpush.msra.mxu0 0.0
  %255 = vmatpush.msra.mxu0 0.0
  %256 = vmatpush.msra.mxu0 0.0
  %257 = vmatpush.msra.mxu0 0.0
  %258 = vmatpush.msra.mxu0 0.0
  %259 = vmatpush.msra.mxu0 %v159
  %260 = vmatpush.msra.mxu0 %v156
  %261 = vmatmul.f32.gmra.mxu0 %v203
  %v262 = vpop.f32.mrf.mxu0
  %v263 = vadd.f32 %v231, %v262
  %264 = vmatmul.f32.gmra.mxu0 %v205
  %v265 = vpop.f32.mrf.mxu0
  %v266 = vadd.f32 %v234, %v265
  %267 = vmatmul.f32.gmra.mxu0 %v207
  %v268 = vpop.f32.mrf.mxu0
  %v269 = vadd.f32 %v237, %v268
  %270 = vmatmul.f32.gmra.mxu0 %v209
  %v271 = vpop.f32.mrf.mxu0
  %v272 = vadd.f32 %v240, %v271
  %273 = vmatmul.f32.gmra.mxu0 %v211
  %v274 = vpop.f32.mrf.mxu0
  %v275 = vadd.f32 %v243, %v274
  %276 = vdwg.mxu0
  %277 = vmatpush.msra.mxu0 %v154
  %278 = vmatpush.msra.mxu0 %v151
  %279 = vmatpush.msra.mxu0 %v148
  %280 = vmatpush.msra.mxu0 %v145
  %281 = vmatpush.msra.mxu0 %v142
  %282 = vmatpush.msra.mxu0 %v139
  %283 = vmatpush.msra.mxu0 %v136
  %284 = vmatpush.msra.mxu0 %v133
  %285 = vmatpush.msra.mxu0 %v130
  %286 = vmatpush.msra.mxu0 %v127
  %287 = vmatpush.msra.mxu0 %v124
  %288 = vmatpush.msra.mxu0 %v121
  %289 = vmatpush.msra.mxu0 %v118
  %290 = vmatpush.msra.mxu0 %v115
  %291 = vmatpush.msra.mxu0 %v112
  %292 = vmatpush.msra.mxu0 %v109
  %293 = vmatmul.f32.gmra.mxu0 %v177
  %v294 = vpop.f32.mrf.mxu0
  %v295 = vadd.f32 0.0, %v294
  %296 = vmatmul.f32.gmra.mxu0 %v179
  %v297 = vpop.f32.mrf.mxu0
  %v298 = vadd.f32 0.0, %v297
  %299 = vmatmul.f32.gmra.mxu0 %v189
  %v300 = vpop.f32.mrf.mxu0
  %v301 = vadd.f32 0.0, %v300
  %302 = vmatmul.f32.gmra.mxu0 %v191
  %v303 = vpop.f32.mrf.mxu0
  %v304 = vadd.f32 0.0, %v303
  %305 = vmatmul.f32.gmra.mxu0 %v195
  %v306 = vpop.f32.mrf.mxu0
  %v307 = vadd.f32 0.0, %v306
  %308 = vdwg.mxu0
  %309 = vmatpush.msra.mxu0 0.0
  %310 = vmatpush.msra.mxu0 0.0
  %311 = vmatpush.msra.mxu0 0.0
  %312 = vmatpush.msra.mxu0 0.0
  %313 = vmatpush.msra.mxu0 0.0
  %314 = vmatpush.msra.mxu0 0.0
  %315 = vmatpush.msra.mxu0 0.0
  %316 = vmatpush.msra.mxu0 0.0
  %317 = vmatpush.msra.mxu0 0.0
  %318 = vmatpush.msra.mxu0 0.0
  %319 = vmatpush.msra.mxu0 0.0
  %320 = vmatpush.msra.mxu0 0.0
  %321 = vmatpush.msra.mxu0 0.0
  %322 = vmatpush.msra.mxu0 0.0
  %323 = vmatpush.msra.mxu0 %v160
  %324 = vmatpush.msra.mxu0 %v157
  %325 = vmatmul.f32.gmra.mxu0 %v203
  %v326 = vpop.f32.mrf.mxu0
  %v327 = vadd.f32 %v295, %v326
  %328 = vmatmul.f32.gmra.mxu0 %v205
  %v329 = vpop.f32.mrf.mxu0
  %v330 = vadd.f32 %v298, %v329
  %331 = vmatmul.f32.gmra.mxu0 %v207
  %v332 = vpop.f32.mrf.mxu0
  %v333 = vadd.f32 %v301, %v332
  %334 = vmatmul.f32.gmra.mxu0 %v209
  %v335 = vpop.f32.mrf.mxu0
  %v336 = vadd.f32 %v304, %v335
  %337 = vmatmul.f32.gmra.mxu0 %v211
  %v338 = vpop.f32.mrf.mxu0
  %v339 = vadd.f32 %v307, %v338
  %340 = vdwg.mxu0
  %341 = vmatpush.msra.mxu0 %v155
  %342 = vmatpush.msra.mxu0 %v152
  %343 = vmatpush.msra.mxu0 %v149
  %344 = vmatpush.msra.mxu0 %v146
  %345 = vmatpush.msra.mxu0 %v143
  %346 = vmatpush.msra.mxu0 %v140
  %347 = vmatpush.msra.mxu0 %v137
  %348 = vmatpush.msra.mxu0 %v134
  %349 = vmatpush.msra.mxu0 %v131
  %350 = vmatpush.msra.mxu0 %v128
  %351 = vmatpush.msra.mxu0 %v125
  %352 = vmatpush.msra.mxu0 %v122
  %353 = vmatpush.msra.mxu0 %v119
  %354 = vmatpush.msra.mxu0 %v116
  %355 = vmatpush.msra.mxu0 %v113
  %356 = vmatpush.msra.mxu0 %v110
  %357 = vmatmul.f32.gmra.mxu0 %v177
  %v358 = vpop.f32.mrf.mxu0
  %v359 = vadd.f32 0.0, %v358
  %360 = vmatmul.f32.gmra.mxu0 %v179
  %v361 = vpop.f32.mrf.mxu0
  %v362 = vadd.f32 0.0, %v361
  %363 = vmatmul.f32.gmra.mxu0 %v189
  %v364 = vpop.f32.mrf.mxu0
  %v365 = vadd.f32 0.0, %v364
  %366 = vmatmul.f32.gmra.mxu0 %v191
  %v367 = vpop.f32.mrf.mxu0
  %v368 = vadd.f32 0.0, %v367
  %369 = vmatmul.f32.gmra.mxu0 %v195
  %v370 = vpop.f32.mrf.mxu0
  %v371 = vadd.f32 0.0, %v370
  %372 = vdwg.mxu0
  %373 = vmatpush.msra.mxu0 0.0
  %374 = vmatpush.msra.mxu0 0.0
  %375 = vmatpush.msra.mxu0 0.0
  %376 = vmatpush.msra.mxu0 0.0
  %377 = vmatpush.msra.mxu0 0.0
  %378 = vmatpush.msra.mxu0 0.0
  %379 = vmatpush.msra.mxu0 0.0
  %380 = vmatpush.msra.mxu0 0.0
  %381 = vmatpush.msra.mxu0 0.0
  %382 = vmatpush.msra.mxu0 0.0
  %383 = vmatpush.msra.mxu0 0.0
  %384 = vmatpush.msra.mxu0 0.0
  %385 = vmatpush.msra.mxu0 0.0
  %386 = vmatpush.msra.mxu0 0.0
  %387 = vmatpush.msra.mxu0 %v161
  %388 = vmatpush.msra.mxu0 %v158
  %389 = vmatmul.f32.gmra.mxu0 %v203
  %v390 = vpop.f32.mrf.mxu0
  %v391 = vadd.f32 %v359, %v390
  %392 = vmatmul.f32.gmra.mxu0 %v205
  %v393 = vpop.f32.mrf.mxu0
  %v394 = vadd.f32 %v362, %v393
  %395 = vmatmul.f32.gmra.mxu0 %v207
  %v396 = vpop.f32.mrf.mxu0
  %v397 = vadd.f32 %v365, %v396
  %398 = vmatmul.f32.gmra.mxu0 %v209
  %v399 = vpop.f32.mrf.mxu0
  %v400 = vadd.f32 %v368, %v399
  %401 = vmatmul.f32.gmra.mxu0 %v211
  %v402 = vpop.f32.mrf.mxu0
  %v403 = vadd.f32 %v371, %v402
  %404 = vdwg.mxu0
  %v405 = vld [vmem:[%s2] sm:$0x7]
  %v407 = vperm.slane %v405, 0
  %v408 = vperm.slane %v405, 1
  %v409 = vperm.slane %v405, 2
  %v413 = vmul.f32 %v263, %v407
  %v414 = vmul.f32 %v327, %v408
  %v415 = vmul.f32 %v391, %v409
  %v416 = vmul.f32 %v266, %v407
  %v417 = vmul.f32 %v330, %v408
  %v418 = vmul.f32 %v394, %v409
  %v419 = vmul.f32 %v269, %v407
  %v420 = vmul.f32 %v333, %v408
  %v421 = vmul.f32 %v397, %v409
  %v422 = vmul.f32 %v272, %v407
  %v423 = vmul.f32 %v336, %v408
  %v424 = vmul.f32 %v400, %v409
  %v425 = vmul.f32 %v275, %v407
  %v426 = vmul.f32 %v339, %v408
  %v427 = vmul.f32 %v403, %v409
  %v428 = vld [vmem:[%s3] sm:$0x7]
  %v430 = vperm.slane %v428, 0
  %v431 = vperm.slane %v428, 1
  %v432 = vperm.slane %v428, 2
  %v436 = vadd.f32 %v413, %v430
  %v437 = vadd.f32 %v414, %v431
  %v438 = vadd.f32 %v415, %v432
  %v439 = vadd.f32 %v416, %v430
  %v440 = vadd.f32 %v417, %v431
  %v441 = vadd.f32 %v418, %v432
  %v442 = vadd.f32 %v419, %v430
  %v443 = vadd.f32 %v420, %v431
  %v444 = vadd.f32 %v421, %v432
  %v445 = vadd.f32 %v422, %v430
  %v446 = vadd.f32 %v423, %v431
  %v447 = vadd.f32 %v424, %v432
  %v448 = vadd.f32 %v425, %v430
  %v449 = vadd.f32 %v426, %v431
  %v450 = vadd.f32 %v427, %v432
  %v451 = vadd.f32 %v436, 3.0
  %v452 = vadd.f32 %v437, 3.0
  %v453 = vadd.f32 %v438, 3.0
  %v454 = vadd.f32 %v439, 3.0
  %v455 = vadd.f32 %v440, 3.0
  %v456 = vadd.f32 %v441, 3.0
  %v457 = vadd.f32 %v442, 3.0
  %v458 = vadd.f32 %v443, 3.0
  %v459 = vadd.f32 %v444, 3.0
  %v460 = vadd.f32 %v445, 3.0
  %v461 = vadd.f32 %v446, 3.0
  %v462 = vadd.f32 %v447, 3.0
  %v463 = vadd.f32 %v448, 3.0
  %v464 = vadd.f32 %v449, 3.0
  %v465 = vadd.f32 %v450, 3.0
  %v466 = vmax.f32 %v451, 0.0
  %v467 = vmax.f32 %v452, 0.0
  %v468 = vmax.f32 %v453, 0.0
  %v469 = vmax.f32 %v454, 0.0
  %v470 = vmax.f32 %v455, 0.0
  %v471 = vmax.f32 %v456, 0.0
  %v472 = vmax.f32 %v457, 0.0
  %v473 = vmax.f32 %v458, 0.0
  %v474 = vmax.f32 %v459, 0.0
  %v475 = vmax.f32 %v460, 0.0
  %v476 = vmax.f32 %v461, 0.0
  %v477 = vmax.f32 %v462, 0.0
  %v478 = vmax.f32 %v463, 0.0
  %v479 = vmax.f32 %v464, 0.0
  %v480 = vmax.f32 %v465, 0.0
  %v481 = vmin.f32 %v466, 6.0
  %v482 = vmin.f32 %v467, 6.0
  %v483 = vmin.f32 %v468, 6.0
  %v484 = vmin.f32 %v469, 6.0
  %v485 = vmin.f32 %v470, 6.0
  %v486 = vmin.f32 %v471, 6.0
  %v487 = vmin.f32 %v472, 6.0
  %v488 = vmin.f32 %v473, 6.0
  %v489 = vmin.f32 %v474, 6.0
  %v490 = vmin.f32 %v475, 6.0
  %v491 = vmin.f32 %v476, 6.0
  %v492 = vmin.f32 %v477, 6.0
  %v493 = vmin.f32 %v478, 6.0
  %v494 = vmin.f32 %v479, 6.0
  %v495 = vmin.f32 %v480, 6.0
  %v496 = vmul.f32 %v436, %v481
  %v497 = vmul.f32 %v437, %v482
  %v498 = vmul.f32 %v438, %v483
  %v499 = vmul.f32 %v439, %v484
  %v500 = vmul.f32 %v440, %v485
  %v501 = vmul.f32 %v441, %v486
  %v502 = vmul.f32 %v442, %v487
  %v503 = vmul.f32 %v443, %v488
  %v504 = vmul.f32 %v444, %v489
  %v505 = vmul.f32 %v445, %v490
  %v506 = vmul.f32 %v446, %v491
  %v507 = vmul.f32 %v447, %v492
  %v508 = vmul.f32 %v448, %v493
  %v509 = vmul.f32 %v449, %v494
  %v510 = vmul.f32 %v450, %v495
  %v511 = vmul.f32 %v496, 0.16666667
  %v512 = vmul.f32 %v497, 0.16666667
  %v513 = vmul.f32 %v498, 0.16666667
  %v514 = vmul.f32 %v499, 0.16666667
  %v515 = vmul.f32 %v500, 0.16666667
  %v516 = vmul.f32 %v501, 0.16666667
  %v517 = vmul.f32 %v502, 0.16666667
  %v518 = vmul.f32 %v503, 0.16666667
  %v519 = vmul.f32 %v504, 0.16666667
  %v520 = vmul.f32 %v505, 0.16666667
  %v521 = vmul.f32 %v506, 0.16666667
  %v522 = vmul.f32 %v507, 0.16666667
  %v523 = vmul.f32 %v508, 0.16666667
  %v524 = vmul.f32 %v509, 0.16666667
  %v525 = vmul.f32 %v510, 0.16666667
  %v541 = vrot.slane %v512, 6
  %v542 = vrot.slane %v513, 4
  %v543 = vrot.slane %v515, 6
  %v544 = vrot.slane %v516, 4
  %v545 = vrot.slane %v518, 6
  %v546 = vrot.slane %v519, 4
  %v547 = vrot.slane %v521, 6
  %v548 = vrot.slane %v522, 4
  %v549 = vrot.slane %v524, 6
  %v550 = vrot.slane %v525, 4
  %v551 = vsel %vm74, %v511, %v541
  %vm552 = vcmask 1043456
  %v553 = vsel %vm552, %v551, %v542
  %v554 = vsel %vm76, %v511, %v541
  %vm555 = vcmask 1045506
  %v556 = vsel %vm555, %v554, %v542
  %v557 = vrot.slane %v556, 2
  %v558 = vsel %vm79, %v511, %v541
  %v559 = vsel %vm552, %v542, %v558
  %v560 = vrot.slane %v559, 4
  %v561 = vsel %vm82, %v541, %v511
  %v562 = vsel %vm555, %v542, %v561
  %v563 = vrot.slane %v562, 6
  %v564 = vsel %vm74, %v514, %v543
  %v565 = vsel %vm552, %v564, %v544
  %v566 = vsel %vm76, %v514, %v543
  %v567 = vsel %vm555, %v566, %v544
  %v568 = vrot.slane %v567, 2
  %v569 = vsel %vm79, %v514, %v543
  %v570 = vsel %vm552, %v544, %v569
  %v571 = vrot.slane %v570, 4
  %v572 = vsel %vm82, %v543, %v514
  %v573 = vsel %vm555, %v544, %v572
  %v574 = vrot.slane %v573, 6
  %v575 = vsel %vm74, %v517, %v545
  %v576 = vsel %vm552, %v575, %v546
  %v577 = vsel %vm76, %v517, %v545
  %v578 = vsel %vm555, %v577, %v546
  %v579 = vrot.slane %v578, 2
  %v580 = vsel %vm79, %v517, %v545
  %v581 = vsel %vm552, %v546, %v580
  %v582 = vrot.slane %v581, 4
  %v583 = vsel %vm82, %v545, %v517
  %v584 = vsel %vm555, %v546, %v583
  %v585 = vrot.slane %v584, 6
  %v586 = vsel %vm74, %v520, %v547
  %v587 = vsel %vm552, %v586, %v548
  %v588 = vsel %vm76, %v520, %v547
  %v589 = vsel %vm555, %v588, %v548
  %v590 = vrot.slane %v589, 2
  %v591 = vsel %vm79, %v520, %v547
  %v592 = vsel %vm552, %v548, %v591
  %v593 = vrot.slane %v592, 4
  %v594 = vsel %vm82, %v547, %v520
  %v595 = vsel %vm555, %v548, %v594
  %v596 = vrot.slane %v595, 6
  %v597 = vsel %vm74, %v523, %v549
  %v598 = vsel %vm552, %v597, %v550
  %v599 = vsel %vm76, %v523, %v549
  %v600 = vsel %vm555, %v599, %v550
  %v601 = vrot.slane %v600, 2
  %v602 = vlaneseq
  %v603 = vshrl.u32 %v602, 7
  %v604 = vadd.s32 %v603, 8
  %v605 = vadd.s32 %v603, 16
  %v606 = vlaneseq
  %v607 = vand.u32 %v606, 127
  %v608 = vadd.s32 %v607, 128
  %v609 = vadd.s32 %v607, 256
  %vm610 = vcmp.ge.s32.totalorder %v603, 1
  %vm611 = vcmp.ge.s32.totalorder %v604, 1
  %vm612 = vcmp.ge.s32.totalorder %v605, 1
  %vm613 = vcmp.lt.s32.totalorder %v603, 17
  %vm614 = vcmp.lt.s32.totalorder %v604, 17
  %vm615 = vcmp.lt.s32.totalorder %v605, 17
  %vm616 = vmand %vm610, %vm613
  %vm617 = vmand %vm611, %vm614
  %vm618 = vmand %vm612, %vm615
  %vm619 = vcmp.ge.s32.totalorder %v607, 16
  %vm620 = vcmp.ge.s32.totalorder %v608, 16
  %vm621 = vcmp.ge.s32.totalorder %v609, 16
  %v622 = vsel %vm616, 1, 0
  %v623 = vsel %vm617, 1, 0
  %v624 = vsel %vm618, 1, 0
  %vm625 = vcmp.eq.s32.totalorder %v622, 1
  %vm626 = vcmp.eq.s32.totalorder %v623, 1
  %vm627 = vcmp.eq.s32.totalorder %v624, 1
  %v628 = vsel %vm619, 1, 0
  %v629 = vsel %vm620, 1, 0
  %v630 = vsel %vm621, 1, 0
  %vm631 = vcmp.eq.s32.totalorder %v628, 1
  %vm632 = vcmp.eq.s32.totalorder %v629, 1
  %vm633 = vcmp.eq.s32.totalorder %v630, 1
  %vm634 = vmand %vm625, %vm631
  %vm635 = vmand %vm625, %vm632
  %vm636 = vmand %vm625, %vm633
  %vm637 = vmand %vm626, %vm631
  %vm638 = vmand %vm626, %vm632
  %vm639 = vmand %vm626, %vm633
  %vm640 = vmand %vm627, %vm631
  %vm641 = vmand %vm627, %vm632
  %vm642 = vmand %vm627, %vm633
  %vm643 = vcmp.lt.s32.totalorder %v607, 272
  %vm644 = vcmp.lt.s32.totalorder %v608, 272
  %vm645 = vcmp.lt.s32.totalorder %v609, 272
  %v646 = vsel %vm643, 1, 0
  %v647 = vsel %vm644, 1, 0
  %v648 = vsel %vm645, 1, 0
  %vm649 = vcmp.eq.s32.totalorder %v646, 1
  %vm650 = vcmp.eq.s32.totalorder %v647, 1
  %vm651 = vcmp.eq.s32.totalorder %v648, 1
  %vm652 = vmand %vm634, %vm649
  %vm653 = vmand %vm635, %vm650
  %vm654 = vmand %vm636, %vm651
  %vm655 = vmand %vm637, %vm649
  %vm656 = vmand %vm638, %vm650
  %vm657 = vmand %vm639, %vm651
  %vm658 = vmand %vm640, %vm649
  %vm659 = vmand %vm641, %vm650
  %vm660 = vmand %vm642, %vm651
  %v661 = vsel %vm652, 1, 0
  %v662 = vsel %vm653, 1, 0
  %v663 = vsel %vm654, 1, 0
  %v664 = vsel %vm655, 1, 0
  %v665 = vsel %vm656, 1, 0
  %v666 = vsel %vm657, 1, 0
  %v667 = vsel %vm658, 1, 0
  %v668 = vsel %vm659, 1, 0
  %v669 = vsel %vm660, 1, 0
  %vm670 = vcmp.eq.s32.totalorder %v661, 1
  %vm671 = vcmp.eq.s32.totalorder %v662, 1
  %vm672 = vcmp.eq.s32.totalorder %v663, 1
  %vm673 = vcmp.eq.s32.totalorder %v664, 1
  %vm674 = vcmp.eq.s32.totalorder %v665, 1
  %vm675 = vcmp.eq.s32.totalorder %v666, 1
  %vm676 = vcmp.eq.s32.totalorder %v667, 1
  %vm677 = vcmp.eq.s32.totalorder %v668, 1
  %vm678 = vcmp.eq.s32.totalorder %v669, 1
  %679 = vst [vmem:[#allocation1] ss:$4 sm:$0xff] %v553
  %s680 = scalar_lea.vmem [#allocation1], 1
  %681 = vst [vmem:[%s680] ss:$4 sm:$0xff] %v557
  %s682 = scalar_lea.vmem [#allocation1], 2
  %683 = vst [vmem:[%s682] ss:$4 sm:$0xff] %v560
  %s684 = scalar_lea.vmem [#allocation1], 3
  %685 = vst [vmem:[%s684] ss:$4 sm:$0xff] %v563
  %s686 = scalar_lea.vmem [#allocation1], 32
  %687 = vst [vmem:[%s686] ss:$4 sm:$0xff] %v565
  %s688 = scalar_lea.vmem [#allocation1], 33
  %689 = vst [vmem:[%s688] ss:$4 sm:$0xff] %v568
  %s690 = scalar_lea.vmem [#allocation1], 34
  %691 = vst [vmem:[%s690] ss:$4 sm:$0xff] %v571
  %s692 = scalar_lea.vmem [#allocation1], 35
  %693 = vst [vmem:[%s692] ss:$4 sm:$0xff] %v574
  %v694 = vld.sshfl [vmem:[#allocation1] sm:$0xff pattern:$0x73625140]
  %v695 = vld.sshfl [vmem:[#allocation1 + $0x8] sm:$0xff pattern:$0x73625140]
  %v696 = vld.sshfl [vmem:[#allocation1 + $0x10] sm:$0xff pattern:$0x73625140]
  %v697 = vld.sshfl [vmem:[#allocation1 + $0x20] sm:$0xff pattern:$0x73625140]
  %v698 = vld.sshfl [vmem:[#allocation1 + $0x28] sm:$0xff pattern:$0x73625140]
  %v699 = vld.sshfl [vmem:[#allocation1 + $0x30] sm:$0xff pattern:$0x73625140]
  %700 = vst [vmem:[#allocation1] ss:$4 sm:$0xff] %v576
  %v701 = vld.sshfl [vmem:[#allocation1] sm:$0xff pattern:$0x73625140]
  %v702 = vld.sshfl [vmem:[#allocation1 + $0x8] sm:$0xff pattern:$0x73625140]
  %v703 = vld.sshfl [vmem:[#allocation1 + $0x10] sm:$0xff pattern:$0x73625140]
  %704 = vst [vmem:[%s686] ss:$4 sm:$0xff] %v579
  %705 = vst [vmem:[%s688] ss:$4 sm:$0xff] %v582
  %706 = vst [vmem:[%s690] ss:$4 sm:$0xff] %v585
  %707 = vst [vmem:[%s692] ss:$4 sm:$0xff] %v587
  %v708 = vld.sshfl [vmem:[#allocation1 + $0x20] sm:$0xff pattern:$0x73625140]
  %v709 = vld.sshfl [vmem:[#allocation1 + $0x28] sm:$0xff pattern:$0x73625140]
  %v710 = vld.sshfl [vmem:[#allocation1 + $0x30] sm:$0xff pattern:$0x73625140]
  %711 = vst [vmem:[#allocation1] ss:$4 sm:$0xff] %v590
  %712 = vst [vmem:[%s680] ss:$4 sm:$0xff] %v593
  %713 = vst [vmem:[%s682] ss:$4 sm:$0xff] %v596
  %714 = vst [vmem:[%s684] ss:$4 sm:$0xff] %v598
  %715 = vst [vmem:[%s686] ss:$4 sm:$0xff] %v601
  %v716 = vld.sshfl [vmem:[#allocation1] sm:$0xff pattern:$0x73625140]
  %v717 = vld.sshfl [vmem:[#allocation1 + $0x8] sm:$0xff pattern:$0x73625140]
  %v718 = vld.sshfl [vmem:[#allocation1 + $0x10] sm:$0xff pattern:$0x73625140]
  %v719 = vld.sshfl [vmem:[#allocation1 + $0x20] sm:$0xff pattern:$0x73625140]
  %v720 = vld.sshfl [vmem:[#allocation1 + $0x28] sm:$0xff pattern:$0x73625140]
  %v721 = vld.sshfl [vmem:[#allocation1 + $0x30] sm:$0xff pattern:$0x73625140]
  %v740 = vsel %vm670, %v694, 0.0
  %v741 = vsel %vm671, %v695, 0.0
  %v742 = vsel %vm672, %v696, 0.0
  %v743 = vsel %vm673, %v697, 0.0
  %v744 = vsel %vm674, %v698, 0.0
  %v745 = vsel %vm675, %v699, 0.0
  %v746 = vsel %vm676, %v701, 0.0
  %v747 = vsel %vm677, %v702, 0.0
  %v748 = vsel %vm678, %v703, 0.0
  %v749 = vsel %vm670, %v708, 0.0
  %v750 = vsel %vm671, %v709, 0.0
  %v751 = vsel %vm672, %v710, 0.0
  %v752 = vsel %vm673, %v716, 0.0
  %v753 = vsel %vm674, %v717, 0.0
  %v754 = vsel %vm675, %v718, 0.0
  %v755 = vsel %vm676, %v719, 0.0
  %v756 = vsel %vm677, %v720, 0.0
  %v757 = vsel %vm678, %v721, 0.0
  %v758 = vld [vmem:[%s4] ss:$8 sm:$0x3]
  %v760 = vperm.slane %v758, 0
  %v761 = vperm.slane %v758, 1
  %v764 = vmul.f32 %v740, %v760
  %v765 = vmul.f32 %v741, %v761
  %v766 = vmul.f32 %v743, %v760
  %v767 = vmul.f32 %v744, %v761
  %v768 = vmul.f32 %v749, %v760
  %v769 = vmul.f32 %v750, %v761
  %v770 = vmul.f32 %v752, %v760
  %v771 = vmul.f32 %v753, %v761
  %v772 = vadd.f32 %v764, 0.0
  %v773 = vadd.f32 %v765, 0.0
  %v774 = vadd.f32 %v766, 0.0
  %v775 = vadd.f32 %v767, 0.0
  %v776 = vadd.f32 %v768, 0.0
  %v777 = vadd.f32 %v769, 0.0
  %v778 = vadd.f32 %v770, 0.0
  %v779 = vadd.f32 %v771, 0.0
  %s780 = scalar_lea.vmem %s4, 1
  %v781 = vld [vmem:[%s780] ss:$8 sm:$0x3]
  %v783 = vperm.slane %v781, 0
  %v784 = vperm.slane %v781, 1
  %785 = vrot.lane.b32.xlu0 %v783, 16
  %v786 = vpop.permute.xlu0 %785
  %787 = vrot.lane.b32.xlu0 %v784, 16
  %v788 = vpop.permute.xlu0 %787
  %v789 = vsel %vm202, %v786, %v788
  %v793 = vmul.f32 %v740, %v786
  %v794 = vmul.f32 %v741, %v789
  %v795 = vmul.f32 %v742, %v788
  %v796 = vmul.f32 %v743, %v786
  %v797 = vmul.f32 %v744, %v789
  %v798 = vmul.f32 %v745, %v788
  %v799 = vmul.f32 %v749, %v786
  %v800 = vmul.f32 %v750, %v789
  %v801 = vmul.f32 %v751, %v788
  %v802 = vmul.f32 %v752, %v786
  %v803 = vmul.f32 %v753, %v789
  %v804 = vmul.f32 %v754, %v788
  %817 = vrot.lane.b32.xlu0 %v793, 112
  %v818 = vpop.permute.xlu0 %817
  %819 = vrot.lane.b32.xlu0 %v794, 112
  %v820 = vpop.permute.xlu0 %819
  %821 = vrot.lane.b32.xlu0 %v795, 112
  %v822 = vpop.permute.xlu0 %821
  %823 = vrot.lane.b32.xlu0 %v796, 112
  %v824 = vpop.permute.xlu0 %823
  %825 = vrot.lane.b32.xlu0 %v797, 112
  %v826 = vpop.permute.xlu0 %825
  %827 = vrot.lane.b32.xlu0 %v798, 112
  %v828 = vpop.permute.xlu0 %827
  %829 = vrot.lane.b32.xlu0 %v799, 112
  %v830 = vpop.permute.xlu0 %829
  %831 = vrot.lane.b32.xlu0 %v800, 112
  %v832 = vpop.permute.xlu0 %831
  %833 = vrot.lane.b32.xlu0 %v801, 112
  %v834 = vpop.permute.xlu0 %833
  %835 = vrot.lane.b32.xlu0 %v802, 112
  %v836 = vpop.permute.xlu0 %835
  %837 = vrot.lane.b32.xlu0 %v803, 112
  %v838 = vpop.permute.xlu0 %837
  %839 = vrot.lane.b32.xlu0 %v804, 112
  %v840 = vpop.permute.xlu0 %839
  %vm841 = vcmask 916480
  %v842 = vsel %vm841, %v818, %v820
  %v843 = vsel %vm841, %v820, %v822
  %v844 = vsel %vm841, %v824, %v826
  %v845 = vsel %vm841, %v826, %v828
  %v846 = vsel %vm841, %v830, %v832
  %v847 = vsel %vm841, %v832, %v834
  %v848 = vsel %vm841, %v836, %v838
  %v849 = vsel %vm841, %v838, %v840
  %v858 = vadd.f32 %v772, %v842
  %v859 = vadd.f32 %v773, %v843
  %v860 = vadd.f32 %v774, %v844
  %v861 = vadd.f32 %v775, %v845
  %v862 = vadd.f32 %v776, %v846
  %v863 = vadd.f32 %v777, %v847
  %v864 = vadd.f32 %v778, %v848
  %v865 = vadd.f32 %v779, %v849
  %s866 = scalar_lea.vmem %s4, 2
  %v867 = vld [vmem:[%s866] ss:$8 sm:$0x3]
  %v869 = vperm.slane %v867, 0
  %v870 = vperm.slane %v867, 1
  %871 = vrot.lane.b32.xlu0 %v869, 32
  %v872 = vpop.permute.xlu0 %871
  %873 = vrot.lane.b32.xlu0 %v870, 32
  %v874 = vpop.permute.xlu0 %873
  %vm875 = vcmask 261120
  %v876 = vsel %vm875, %v872, %v874
  %v880 = vmul.f32 %v740, %v872
  %v881 = vmul.f32 %v741, %v876
  %v882 = vmul.f32 %v742, %v874
  %v883 = vmul.f32 %v743, %v872
  %v884 = vmul.f32 %v744, %v876
  %v885 = vmul.f32 %v745, %v874
  %v886 = vmul.f32 %v749, %v872
  %v887 = vmul.f32 %v750, %v876
  %v888 = vmul.f32 %v751, %v874
  %v889 = vmul.f32 %v752, %v872
  %v890 = vmul.f32 %v753, %v876
  %v891 = vmul.f32 %v754, %v874
  %904 = vrot.lane.b32.xlu0 %v880, 96
  %v905 = vpop.permute.xlu0 %904
  %906 = vrot.lane.b32.xlu0 %v881, 96
  %v907 = vpop.permute.xlu0 %906
  %908 = vrot.lane.b32.xlu0 %v882, 96
  %v909 = vpop.permute.xlu0 %908
  %910 = vrot.lane.b32.xlu0 %v883, 96
  %v911 = vpop.permute.xlu0 %910
  %912 = vrot.lane.b32.xlu0 %v884, 96
  %v913 = vpop.permute.xlu0 %912
  %914 = vrot.lane.b32.xlu0 %v885, 96
  %v915 = vpop.permute.xlu0 %914
  %916 = vrot.lane.b32.xlu0 %v886, 96
  %v917 = vpop.permute.xlu0 %916
  %918 = vrot.lane.b32.xlu0 %v887, 96
  %v919 = vpop.permute.xlu0 %918
  %920 = vrot.lane.b32.xlu0 %v888, 96
  %v921 = vpop.permute.xlu0 %920
  %922 = vrot.lane.b32.xlu0 %v889, 96
  %v923 = vpop.permute.xlu0 %922
  %924 = vrot.lane.b32.xlu0 %v890, 96
  %v925 = vpop.permute.xlu0 %924
  %926 = vrot.lane.b32.xlu0 %v891, 96
  %v927 = vpop.permute.xlu0 %926
  %vm928 = vcmask 785408
  %v929 = vsel %vm928, %v905, %v907
  %v930 = vsel %vm928, %v907, %v909
  %v931 = vsel %vm928, %v911, %v913
  %v932 = vsel %vm928, %v913, %v915
  %v933 = vsel %vm928, %v917, %v919
  %v934 = vsel %vm928, %v919, %v921
  %v935 = vsel %vm928, %v923, %v925
  %v936 = vsel %vm928, %v925, %v927
  %v945 = vadd.f32 %v858, %v929
  %v946 = vadd.f32 %v859, %v930
  %v947 = vadd.f32 %v860, %v931
  %v948 = vadd.f32 %v861, %v932
  %v949 = vadd.f32 %v862, %v933
  %v950 = vadd.f32 %v863, %v934
  %v951 = vadd.f32 %v864, %v935
  %v952 = vadd.f32 %v865, %v936
  %s953 = scalar_lea.vmem %s4, 3
  %v954 = vld [vmem:[%s953] ss:$8 sm:$0x3]
  %v956 = vperm.slane %v954, 0
  %v957 = vperm.slane %v954, 1
  %v960 = vmul.f32 %v740, %v956
  %v961 = vmul.f32 %v741, %v957
  %v962 = vmul.f32 %v743, %v956
  %v963 = vmul.f32 %v744, %v957
  %v964 = vmul.f32 %v746, %v956
  %v965 = vmul.f32 %v747, %v957
  %v966 = vmul.f32 %v749, %v956
  %v967 = vmul.f32 %v750, %v957
  %v968 = vmul.f32 %v752, %v956
  %v969 = vmul.f32 %v753, %v957
  %v970 = vmul.f32 %v755, %v956
  %v971 = vmul.f32 %v756, %v957
  %vm984 = vcmask 1046528
  %v985 = vrot.slane %v960, 1
  %v986 = vrot.slane %v962, 1
  %v987 = vsel %vm984, %v985, %v986
  %v988 = vrot.slane %v961, 1
  %v989 = vrot.slane %v963, 1
  %v990 = vsel %vm984, %v988, %v989
  %v991 = vrot.slane %v964, 1
  %v992 = vsel %vm984, %v986, %v991
  %v993 = vrot.slane %v965, 1
  %v994 = vsel %vm984, %v989, %v993
  %v995 = vrot.slane %v966, 1
  %v996 = vrot.slane %v968, 1
  %v997 = vsel %vm984, %v995, %v996
  %v998 = vrot.slane %v967, 1
  %v999 = vrot.slane %v969, 1
  %v1000 = vsel %vm984, %v998, %v999
  %v1001 = vrot.slane %v970, 1
  %v1002 = vsel %vm984, %v996, %v1001
  %v1003 = vrot.slane %v971, 1
  %v1004 = vsel %vm984, %v999, %v1003
  %v1013 = vadd.f32 %v945, %v987
  %v1014 = vadd.f32 %v946, %v990
  %v1015 = vadd.f32 %v947, %v992
  %v1016 = vadd.f32 %v948, %v994
  %v1017 = vadd.f32 %v949, %v997
  %v1018 = vadd.f32 %v950, %v1000
  %v1019 = vadd.f32 %v951, %v1002
  %v1020 = vadd.f32 %v952, %v1004
  %s1021 = scalar_lea.vmem %s4, 4
  %v1022 = vld [vmem:[%s1021] ss:$8 sm:$0x3]
  %v1024 = vperm.slane %v1022, 0
  %v1025 = vperm.slane %v1022, 1
  %1026 = vrot.lane.b32.xlu0 %v1024, 16
  %v1027 = vpop.permute.xlu0 %1026
  %1028 = vrot.lane.b32.xlu0 %v1025, 16
  %v1029 = vpop.permute.xlu0 %1028
  %v1030 = vsel %vm202, %v1027, %v1029
  %v1034 = vmul.f32 %v740, %v1027
  %v1035 = vmul.f32 %v741, %v1030
  %v1036 = vmul.f32 %v742, %v1029
  %v1037 = vmul.f32 %v743, %v1027
  %v1038 = vmul.f32 %v744, %v1030
  %v1039 = vmul.f32 %v745, %v1029
  %v1040 = vmul.f32 %v746, %v1027
  %v1041 = vmul.f32 %v747, %v1030
  %v1042 = vmul.f32 %v748, %v1029
  %v1043 = vmul.f32 %v749, %v1027
  %v1044 = vmul.f32 %v750, %v1030
  %v1045 = vmul.f32 %v751, %v1029
  %v1046 = vmul.f32 %v752, %v1027
  %v1047 = vmul.f32 %v753, %v1030
  %v1048 = vmul.f32 %v754, %v1029
  %v1049 = vmul.f32 %v755, %v1027
  %v1050 = vmul.f32 %v756, %v1030
  %v1051 = vmul.f32 %v757, %v1029
  %v1070 = vrot.slane %v1034, 1
  %v1071 = vrot.slane %v1037, 1
  %v1072 = vsel %vm984, %v1070, %v1071
  %v1073 = vrot.slane %v1035, 1
  %v1074 = vrot.slane %v1038, 1
  %v1075 = vsel %vm984, %v1073, %v1074
  %v1076 = vrot.slane %v1036, 1
  %v1077 = vrot.slane %v1039, 1
  %v1078 = vsel %vm984, %v1076, %v1077
  %v1079 = vrot.slane %v1040, 1
  %v1080 = vsel %vm984, %v1071, %v1079
  %v1081 = vrot.slane %v1041, 1
  %v1082 = vsel %vm984, %v1074, %v1081
  %v1083 = vrot.slane %v1042, 1
  %v1084 = vsel %vm984, %v1077, %v1083
  %v1085 = vrot.slane %v1043, 1
  %v1086 = vrot.slane %v1046, 1
  %v1087 = vsel %vm984, %v1085, %v1086
  %v1088 = vrot.slane %v1044, 1
  %v1089 = vrot.slane %v1047, 1
  %v1090 = vsel %vm984, %v1088, %v1089
  %v1091 = vrot.slane %v1045, 1
  %v1092 = vrot.slane %v1048, 1
  %v1093 = vsel %vm984, %v1091, %v1092
  %v1094 = vrot.slane %v1049, 1
  %v1095 = vsel %vm984, %v1086, %v1094
  %v1096 = vrot.slane %v1050, 1
  %v1097 = vsel %vm984, %v1089, %v1096
  %v1098 = vrot.slane %v1051, 1
  %v1099 = vsel %vm984, %v1092, %v1098
  %1100 = vrot.lane.b32.xlu0 %v1072, 112
  %v1101 = vpop.permute.xlu0 %1100
  %1102 = vrot.lane.b32.xlu0 %v1075, 112
  %v1103 = vpop.permute.xlu0 %1102
  %1104 = vrot.lane.b32.xlu0 %v1078, 112
  %v1105 = vpop.permute.xlu0 %1104
  %1106 = vrot.lane.b32.xlu0 %v1080, 112
  %v1107 = vpop.permute.xlu0 %1106
  %1108 = vrot.lane.b32.xlu0 %v1082, 112
  %v1109 = vpop.permute.xlu0 %1108
  %1110 = vrot.lane.b32.xlu0 %v1084, 112
  %v1111 = vpop.permute.xlu0 %1110
  %1112 = vrot.lane.b32.xlu0 %v1087, 112
  %v1113 = vpop.permute.xlu0 %1112
  %1114 = vrot.lane.b32.xlu0 %v1090, 112
  %v1115 = vpop.permute.xlu0 %1114
  %1116 = vrot.lane.b32.xlu0 %v1093, 112
  %v1117 = vpop.permute.xlu0 %1116
  %1118 = vrot.lane.b32.xlu0 %v1095, 112
  %v1119 = vpop.permute.xlu0 %1118
  %1120 = vrot.lane.b32.xlu0 %v1097, 112
  %v1121 = vpop.permute.xlu0 %1120
  %1122 = vrot.lane.b32.xlu0 %v1099, 112
  %v1123 = vpop.permute.xlu0 %1122
  %v1124 = vsel %vm841, %v1101, %v1103
  %v1125 = vsel %vm841, %v1103, %v1105
  %v1126 = vsel %vm841, %v1107, %v1109
  %v1127 = vsel %vm841, %v1109, %v1111
  %v1128 = vsel %vm841, %v1113, %v1115
  %v1129 = vsel %vm841, %v1115, %v1117
  %v1130 = vsel %vm841, %v1119, %v1121
  %v1131 = vsel %vm841, %v1121, %v1123
  %v1140 = vadd.f32 %v1013, %v1124
  %v1141 = vadd.f32 %v1014, %v1125
  %v1142 = vadd.f32 %v1015, %v1126
  %v1143 = vadd.f32 %v1016, %v1127
  %v1144 = vadd.f32 %v1017, %v1128
  %v1145 = vadd.f32 %v1018, %v1129
  %v1146 = vadd.f32 %v1019, %v1130
  %v1147 = vadd.f32 %v1020, %v1131
  %s1148 = scalar_lea.vmem %s4, 5
  %v1149 = vld [vmem:[%s1148] ss:$8 sm:$0x3]
  %v1151 = vperm.slane %v1149, 0
  %v1152 = vperm.slane %v1149, 1
  %1153 = vrot.lane.b32.xlu0 %v1151, 32
  %v1154 = vpop.permute.xlu0 %1153
  %1155 = vrot.lane.b32.xlu0 %v1152, 32
  %v1156 = vpop.permute.xlu0 %1155
  %v1157 = vsel %vm875, %v1154, %v1156
  %v1161 = vmul.f32 %v740, %v1154
  %v1162 = vmul.f32 %v741, %v1157
  %v1163 = vmul.f32 %v742, %v1156
  %v1164 = vmul.f32 %v743, %v1154
  %v1165 = vmul.f32 %v744, %v1157
  %v1166 = vmul.f32 %v745, %v1156
  %v1167 = vmul.f32 %v746, %v1154
  %v1168 = vmul.f32 %v747, %v1157
  %v1169 = vmul.f32 %v748, %v1156
  %v1170 = vmul.f32 %v749, %v1154
  %v1171 = vmul.f32 %v750, %v1157
  %v1172 = vmul.f32 %v751, %v1156
  %v1173 = vmul.f32 %v752, %v1154
  %v1174 = vmul.f32 %v753, %v1157
  %v1175 = vmul.f32 %v754, %v1156
  %v1176 = vmul.f32 %v755, %v1154
  %v1177 = vmul.f32 %v756, %v1157
  %v1178 = vmul.f32 %v757, %v1156
  %v1197 = vrot.slane %v1161, 1
  %v1198 = vrot.slane %v1164, 1
  %v1199 = vsel %vm984, %v1197, %v1198
  %v1200 = vrot.slane %v1162, 1
  %v1201 = vrot.slane %v1165, 1
  %v1202 = vsel %vm984, %v1200, %v1201
  %v1203 = vrot.slane %v1163, 1
  %v1204 = vrot.slane %v1166, 1
  %v1205 = vsel %vm984, %v1203, %v1204
  %v1206 = vrot.slane %v1167, 1
  %v1207 = vsel %vm984, %v1198, %v1206
  %v1208 = vrot.slane %v1168, 1
  %v1209 = vsel %vm984, %v1201, %v1208
  %v1210 = vrot.slane %v1169, 1
  %v1211 = vsel %vm984, %v1204, %v1210
  %v1212 = vrot.slane %v1170, 1
  %v1213 = vrot.slane %v1173, 1
  %v1214 = vsel %vm984, %v1212, %v1213
  %v1215 = vrot.slane %v1171, 1
  %v1216 = vrot.slane %v1174, 1
  %v1217 = vsel %vm984, %v1215, %v1216
  %v1218 = vrot.slane %v1172, 1
  %v1219 = vrot.slane %v1175, 1
  %v1220 = vsel %vm984, %v1218, %v1219
  %v1221 = vrot.slane %v1176, 1
  %v1222 = vsel %vm984, %v1213, %v1221
  %v1223 = vrot.slane %v1177, 1
  %v1224 = vsel %vm984, %v1216, %v1223
  %v1225 = vrot.slane %v1178, 1
  %v1226 = vsel %vm984, %v1219, %v1225
  %1227 = vrot.lane.b32.xlu0 %v1199, 96
  %v1228 = vpop.permute.xlu0 %1227
  %1229 = vrot.lane.b32.xlu0 %v1202, 96
  %v1230 = vpop.permute.xlu0 %1229
  %1231 = vrot.lane.b32.xlu0 %v1205, 96
  %v1232 = vpop.permute.xlu0 %1231
  %1233 = vrot.lane.b32.xlu0 %v1207, 96
  %v1234 = vpop.permute.xlu0 %1233
  %1235 = vrot.lane.b32.xlu0 %v1209, 96
  %v1236 = vpop.permute.xlu0 %1235
  %1237 = vrot.lane.b32.xlu0 %v1211, 96
  %v1238 = vpop.permute.xlu0 %1237
  %1239 = vrot.lane.b32.xlu0 %v1214, 96
  %v1240 = vpop.permute.xlu0 %1239
  %1241 = vrot.lane.b32.xlu0 %v1217, 96
  %v1242 = vpop.permute.xlu0 %1241
  %1243 = vrot.lane.b32.xlu0 %v1220, 96
  %v1244 = vpop.permute.xlu0 %1243
  %1245 = vrot.lane.b32.xlu0 %v1222, 96
  %v1246 = vpop.permute.xlu0 %1245
  %1247 = vrot.lane.b32.xlu0 %v1224, 96
  %v1248 = vpop.permute.xlu0 %1247
  %1249 = vrot.lane.b32.xlu0 %v1226, 96
  %v1250 = vpop.permute.xlu0 %1249
  %v1251 = vsel %vm928, %v1228, %v1230
  %v1252 = vsel %vm928, %v1230, %v1232
  %v1253 = vsel %vm928, %v1234, %v1236
  %v1254 = vsel %vm928, %v1236, %v1238
  %v1255 = vsel %vm928, %v1240, %v1242
  %v1256 = vsel %vm928, %v1242, %v1244
  %v1257 = vsel %vm928, %v1246, %v1248
  %v1258 = vsel %vm928, %v1248, %v1250
  %v1267 = vadd.f32 %v1140, %v1251
  %v1268 = vadd.f32 %v1141, %v1252
  %v1269 = vadd.f32 %v1142, %v1253
  %v1270 = vadd.f32 %v1143, %v1254
  %v1271 = vadd.f32 %v1144, %v1255
  %v1272 = vadd.f32 %v1145, %v1256
  %v1273 = vadd.f32 %v1146, %v1257
  %v1274 = vadd.f32 %v1147, %v1258
  %s1275 = scalar_lea.vmem %s4, 6
  %v1276 = vld [vmem:[%s1275] ss:$8 sm:$0x3]
  %v1278 = vperm.slane %v1276, 0
  %v1279 = vperm.slane %v1276, 1
  %v1282 = vmul.f32 %v740, %v1278
  %v1283 = vmul.f32 %v741, %v1279
  %v1284 = vmul.f32 %v743, %v1278
  %v1285 = vmul.f32 %v744, %v1279
  %v1286 = vmul.f32 %v746, %v1278
  %v1287 = vmul.f32 %v747, %v1279
  %v1288 = vmul.f32 %v749, %v1278
  %v1289 = vmul.f32 %v750, %v1279
  %v1290 = vmul.f32 %v752, %v1278
  %v1291 = vmul.f32 %v753, %v1279
  %v1292 = vmul.f32 %v755, %v1278
  %v1293 = vmul.f32 %v756, %v1279
  %v1306 = vrot.slane %v1282, 2
  %v1307 = vrot.slane %v1284, 2
  %v1308 = vsel %vm82, %v1306, %v1307
  %v1309 = vrot.slane %v1283, 2
  %v1310 = vrot.slane %v1285, 2
  %v1311 = vsel %vm82, %v1309, %v1310
  %v1312 = vrot.slane %v1286, 2
  %v1313 = vsel %vm82, %v1307, %v1312
  %v1314 = vrot.slane %v1287, 2
  %v1315 = vsel %vm82, %v1310, %v1314
  %v1316 = vrot.slane %v1288, 2
  %v1317 = vrot.slane %v1290, 2
  %v1318 = vsel %vm82, %v1316, %v1317
  %v1319 = vrot.slane %v1289, 2
  %v1320 = vrot.slane %v1291, 2
  %v1321 = vsel %vm82, %v1319, %v1320
  %v1322 = vrot.slane %v1292, 2
  %v1323 = vsel %vm82, %v1317, %v1322
  %v1324 = vrot.slane %v1293, 2
  %v1325 = vsel %vm82, %v1320, %v1324
  %v1334 = vadd.f32 %v1267, %v1308
  %v1335 = vadd.f32 %v1268, %v1311
  %v1336 = vadd.f32 %v1269, %v1313
  %v1337 = vadd.f32 %v1270, %v1315
  %v1338 = vadd.f32 %v1271, %v1318
  %v1339 = vadd.f32 %v1272, %v1321
  %v1340 = vadd.f32 %v1273, %v1323
  %v1341 = vadd.f32 %v1274, %v1325
  %s1342 = scalar_lea.vmem %s4, 7
  %v1343 = vld [vmem:[%s1342] ss:$8 sm:$0x3]
  %v1345 = vperm.slane %v1343, 0
  %v1346 = vperm.slane %v1343, 1
  %1347 = vrot.lane.b32.xlu0 %v1345, 16
  %v1348 = vpop.permute.xlu0 %1347
  %1349 = vrot.lane.b32.xlu0 %v1346, 16
  %v1350 = vpop.permute.xlu0 %1349
  %v1351 = vsel %vm202, %v1348, %v1350
  %v1355 = vmul.f32 %v740, %v1348
  %v1356 = vmul.f32 %v741, %v1351
  %v1357 = vmul.f32 %v742, %v1350
  %v1358 = vmul.f32 %v743, %v1348
  %v1359 = vmul.f32 %v744, %v1351
  %v1360 = vmul.f32 %v745, %v1350
  %v1361 = vmul.f32 %v746, %v1348
  %v1362 = vmul.f32 %v747, %v1351
  %v1363 = vmul.f32 %v748, %v1350
  %v1364 = vmul.f32 %v749, %v1348
  %v1365 = vmul.f32 %v750, %v1351
  %v1366 = vmul.f32 %v751, %v1350
  %v1367 = vmul.f32 %v752, %v1348
  %v1368 = vmul.f32 %v753, %v1351
  %v1369 = vmul.f32 %v754, %v1350
  %v1370 = vmul.f32 %v755, %v1348
  %v1371 = vmul.f32 %v756, %v1351
  %v1372 = vmul.f32 %v757, %v1350
  %v1391 = vrot.slane %v1355, 2
  %v1392 = vrot.slane %v1358, 2
  %v1393 = vsel %vm82, %v1391, %v1392
  %v1394 = vrot.slane %v1356, 2
  %v1395 = vrot.slane %v1359, 2
  %v1396 = vsel %vm82, %v1394, %v1395
  %v1397 = vrot.slane %v1357, 2
  %v1398 = vrot.slane %v1360, 2
  %v1399 = vsel %vm82, %v1397, %v1398
  %v1400 = vrot.slane %v1361, 2
  %v1401 = vsel %vm82, %v1392, %v1400
  %v1402 = vrot.slane %v1362, 2
  %v1403 = vsel %vm82, %v1395, %v1402
  %v1404 = vrot.slane %v1363, 2
  %v1405 = vsel %vm82, %v1398, %v1404
  %v1406 = vrot.slane %v1364, 2
  %v1407 = vrot.slane %v1367, 2
  %v1408 = vsel %vm82, %v1406, %v1407
  %v1409 = vrot.slane %v1365, 2
  %v1410 = vrot.slane %v1368, 2
  %v1411 = vsel %vm82, %v1409, %v1410
  %v1412 = vrot.slane %v1366, 2
  %v1413 = vrot.slane %v1369, 2
  %v1414 = vsel %vm82, %v1412, %v1413
  %v1415 = vrot.slane %v1370, 2
  %v1416 = vsel %vm82, %v1407, %v1415
  %v1417 = vrot.slane %v1371, 2
  %v1418 = vsel %vm82, %v1410, %v1417
  %v1419 = vrot.slane %v1372, 2
  %v1420 = vsel %vm82, %v1413, %v1419
  %1421 = vrot.lane.b32.xlu0 %v1393, 112
  %v1422 = vpop.permute.xlu0 %1421
  %1423 = vrot.lane.b32.xlu0 %v1396, 112
  %v1424 = vpop.permute.xlu0 %1423
  %1425 = vrot.lane.b32.xlu0 %v1399, 112
  %v1426 = vpop.permute.xlu0 %1425
  %1427 = vrot.lane.b32.xlu0 %v1401, 112
  %v1428 = vpop.permute.xlu0 %1427
  %1429 = vrot.lane.b32.xlu0 %v1403, 112
  %v1430 = vpop.permute.xlu0 %1429
  %1431 = vrot.lane.b32.xlu0 %v1405, 112
  %v1432 = vpop.permute.xlu0 %1431
  %1433 = vrot.lane.b32.xlu0 %v1408, 112
  %v1434 = vpop.permute.xlu0 %1433
  %1435 = vrot.lane.b32.xlu0 %v1411, 112
  %v1436 = vpop.permute.xlu0 %1435
  %1437 = vrot.lane.b32.xlu0 %v1414, 112
  %v1438 = vpop.permute.xlu0 %1437
  %1439 = vrot.lane.b32.xlu0 %v1416, 112
  %v1440 = vpop.permute.xlu0 %1439
  %1441 = vrot.lane.b32.xlu0 %v1418, 112
  %v1442 = vpop.permute.xlu0 %1441
  %1443 = vrot.lane.b32.xlu0 %v1420, 112
  %v1444 = vpop.permute.xlu0 %1443
  %v1445 = vsel %vm841, %v1422, %v1424
  %v1446 = vsel %vm841, %v1424, %v1426
  %v1447 = vsel %vm841, %v1428, %v1430
  %v1448 = vsel %vm841, %v1430, %v1432
  %v1449 = vsel %vm841, %v1434, %v1436
  %v1450 = vsel %vm841, %v1436, %v1438
  %v1451 = vsel %vm841, %v1440, %v1442
  %v1452 = vsel %vm841, %v1442, %v1444
  %v1461 = vadd.f32 %v1334, %v1445
  %v1462 = vadd.f32 %v1335, %v1446
  %v1463 = vadd.f32 %v1336, %v1447
  %v1464 = vadd.f32 %v1337, %v1448
  %v1465 = vadd.f32 %v1338, %v1449
  %v1466 = vadd.f32 %v1339, %v1450
  %v1467 = vadd.f32 %v1340, %v1451
  %v1468 = vadd.f32 %v1341, %v1452
  %s1469 = scalar_lea.vmem %s4, 16
  %v1470 = vld [vmem:[%s1469] ss:$8 sm:$0x3]
  %v1472 = vperm.slane %v1470, 0
  %v1473 = vperm.slane %v1470, 1
  %1474 = vrot.lane.b32.xlu0 %v1472, 32
  %v1475 = vpop.permute.xlu0 %1474
  %1476 = vrot.lane.b32.xlu0 %v1473, 32
  %v1477 = vpop.permute.xlu0 %1476
  %v1478 = vsel %vm875, %v1475, %v1477
  %v1482 = vmul.f32 %v740, %v1475
  %v1483 = vmul.f32 %v741, %v1478
  %v1484 = vmul.f32 %v742, %v1477
  %v1485 = vmul.f32 %v743, %v1475
  %v1486 = vmul.f32 %v744, %v1478
  %v1487 = vmul.f32 %v745, %v1477
  %v1488 = vmul.f32 %v746, %v1475
  %v1489 = vmul.f32 %v747, %v1478
  %v1490 = vmul.f32 %v748, %v1477
  %v1491 = vmul.f32 %v749, %v1475
  %v1492 = vmul.f32 %v750, %v1478
  %v1493 = vmul.f32 %v751, %v1477
  %v1494 = vmul.f32 %v752, %v1475
  %v1495 = vmul.f32 %v753, %v1478
  %v1496 = vmul.f32 %v754, %v1477
  %v1497 = vmul.f32 %v755, %v1475
  %v1498 = vmul.f32 %v756, %v1478
  %v1499 = vmul.f32 %v757, %v1477
  %v1518 = vrot.slane %v1482, 2
  %v1519 = vrot.slane %v1485, 2
  %v1520 = vsel %vm82, %v1518, %v1519
  %v1521 = vrot.slane %v1483, 2
  %v1522 = vrot.slane %v1486, 2
  %v1523 = vsel %vm82, %v1521, %v1522
  %v1524 = vrot.slane %v1484, 2
  %v1525 = vrot.slane %v1487, 2
  %v1526 = vsel %vm82, %v1524, %v1525
  %v1527 = vrot.slane %v1488, 2
  %v1528 = vsel %vm82, %v1519, %v1527
  %v1529 = vrot.slane %v1489, 2
  %v1530 = vsel %vm82, %v1522, %v1529
  %v1531 = vrot.slane %v1490, 2
  %v1532 = vsel %vm82, %v1525, %v1531
  %v1533 = vrot.slane %v1491, 2
  %v1534 = vrot.slane %v1494, 2
  %v1535 = vsel %vm82, %v1533, %v1534
  %v1536 = vrot.slane %v1492, 2
  %v1537 = vrot.slane %v1495, 2
  %v1538 = vsel %vm82, %v1536, %v1537
  %v1539 = vrot.slane %v1493, 2
  %v1540 = vrot.slane %v1496, 2
  %v1541 = vsel %vm82, %v1539, %v1540
  %v1542 = vrot.slane %v1497, 2
  %v1543 = vsel %vm82, %v1534, %v1542
  %v1544 = vrot.slane %v1498, 2
  %v1545 = vsel %vm82, %v1537, %v1544
  %v1546 = vrot.slane %v1499, 2
  %v1547 = vsel %vm82, %v1540, %v1546
  %1548 = vrot.lane.b32.xlu0 %v1520, 96
  %v1549 = vpop.permute.xlu0 %1548
  %1550 = vrot.lane.b32.xlu0 %v1523, 96
  %v1551 = vpop.permute.xlu0 %1550
  %1552 = vrot.lane.b32.xlu0 %v1526, 96
  %v1553 = vpop.permute.xlu0 %1552
  %1554 = vrot.lane.b32.xlu0 %v1528, 96
  %v1555 = vpop.permute.xlu0 %1554
  %1556 = vrot.lane.b32.xlu0 %v1530, 96
  %v1557 = vpop.permute.xlu0 %1556
  %1558 = vrot.lane.b32.xlu0 %v1532, 96
  %v1559 = vpop.permute.xlu0 %1558
  %1560 = vrot.lane.b32.xlu0 %v1535, 96
  %v1561 = vpop.permute.xlu0 %1560
  %1562 = vrot.lane.b32.xlu0 %v1538, 96
  %v1563 = vpop.permute.xlu0 %1562
  %1564 = vrot.lane.b32.xlu0 %v1541, 96
  %v1565 = vpop.permute.xlu0 %1564
  %1566 = vrot.lane.b32.xlu0 %v1543, 96
  %v1567 = vpop.permute.xlu0 %1566
  %1568 = vrot.lane.b32.xlu0 %v1545, 96
  %v1569 = vpop.permute.xlu0 %1568
  %1570 = vrot.lane.b32.xlu0 %v1547, 96
  %v1571 = vpop.permute.xlu0 %1570
  %v1572 = vsel %vm928, %v1549, %v1551
  %v1573 = vsel %vm928, %v1551, %v1553
  %v1574 = vsel %vm928, %v1555, %v1557
  %v1575 = vsel %vm928, %v1557, %v1559
  %v1576 = vsel %vm928, %v1561, %v1563
  %v1577 = vsel %vm928, %v1563, %v1565
  %v1578 = vsel %vm928, %v1567, %v1569
  %v1579 = vsel %vm928, %v1569, %v1571
  %v1588 = vadd.f32 %v1461, %v1572
  %v1589 = vadd.f32 %v1462, %v1573
  %v1590 = vadd.f32 %v1463, %v1574
  %v1591 = vadd.f32 %v1464, %v1575
  %v1592 = vadd.f32 %v1465, %v1576
  %v1593 = vadd.f32 %v1466, %v1577
  %v1594 = vadd.f32 %v1467, %v1578
  %v1595 = vadd.f32 %v1468, %v1579
  %v1596 = vld [vmem:[%s5] sm:$0x3]
  %v1598 = vperm.slane %v1596, 0
  %v1599 = vperm.slane %v1596, 1
  %v1602 = vmul.f32 %v1588, %v1598
  %v1603 = vmul.f32 %v1589, %v1599
  %v1604 = vmul.f32 %v1590, %v1598
  %v1605 = vmul.f32 %v1591, %v1599
  %v1606 = vmul.f32 %v1592, %v1598
  %v1607 = vmul.f32 %v1593, %v1599
  %v1608 = vmul.f32 %v1594, %v1598
  %v1609 = vmul.f32 %v1595, %v1599
  %v1610 = vld [vmem:[%s6] sm:$0x3]
  %v1612 = vperm.slane %v1610, 0
  %v1613 = vperm.slane %v1610, 1
  %v1616 = vadd.f32 %v1602, %v1612
  %v1617 = vadd.f32 %v1603, %v1613
  %v1618 = vadd.f32 %v1604, %v1612
  %v1619 = vadd.f32 %v1605, %v1613
  %v1620 = vadd.f32 %v1606, %v1612
  %v1621 = vadd.f32 %v1607, %v1613
  %v1622 = vadd.f32 %v1608, %v1612
  %v1623 = vadd.f32 %v1609, %v1613
  %v1624 = vadd.f32 %v1616, %v1618
  %v1625 = vrot.slane %v1624, 4
  %v1626 = vadd.f32 %v1624, %v1625
  %v1627 = vrot.slane %v1626, 2
  %v1628 = vadd.f32 %v1626, %v1627
  %v1629 = vrot.slane %v1628, 1
  %v1630 = vadd.f32 %v1628, %v1629
  %v1631 = vadd.f32 %v1617, %v1619
  %v1632 = vrot.slane %v1631, 4
  %v1633 = vadd.f32 %v1631, %v1632
  %v1634 = vrot.slane %v1633, 2
  %v1635 = vadd.f32 %v1633, %v1634
  %v1636 = vrot.slane %v1635, 1
  %v1637 = vadd.f32 %v1635, %v1636
  %v1638 = vadd.f32 %v1620, %v1622
  %v1639 = vrot.slane %v1638, 4
  %v1640 = vadd.f32 %v1638, %v1639
  %v1641 = vrot.slane %v1640, 2
  %v1642 = vadd.f32 %v1640, %v1641
  %v1643 = vrot.slane %v1642, 1
  %v1644 = vadd.f32 %v1642, %v1643
  %v1645 = vadd.f32 %v1621, %v1623
  %v1646 = vrot.slane %v1645, 4
  %v1647 = vadd.f32 %v1645, %v1646
  %v1648 = vrot.slane %v1647, 2
  %v1649 = vadd.f32 %v1647, %v1648
  %v1650 = vrot.slane %v1649, 1
  %v1651 = vadd.f32 %v1649, %v1650
  %v1652 = vld [vmem:[%s7] sm:$0xff]
  %v1653 = vld [vmem:[%s7 + $0x8] sm:$0xff]
  %v1654 = vld [vmem:[%s7 + $0x10] sm:$0xff]
  %v1655 = vld [vmem:[%s7 + $0x18] sm:$0xff]
  %v1656 = vld [vmem:[%s7 + $0x20] sm:$0xff]
  %v1657 = vld [vmem:[%s7 + $0x28] sm:$0xff]
  %v1658 = vld [vmem:[%s7 + $0x30] sm:$0xff]
  %v1659 = vld [vmem:[%s7 + $0x38] sm:$0xff]
  %v1660 = vld [vmem:[%s7 + $0x40] sm:$0xff]
  %v1661 = vld [vmem:[%s7 + $0x48] sm:$0xff]
  %v1662 = vld [vmem:[%s7 + $0x50] sm:$0xff]
  %v1663 = vld [vmem:[%s7 + $0x58] sm:$0xff]
  %v1664 = vld [vmem:[%s7 + $0x60] sm:$0xff]
  %v1665 = vld [vmem:[%s7 + $0x68] sm:$0xff]
  %v1666 = vld [vmem:[%s7 + $0x70] sm:$0xff]
  %v1667 = vld [vmem:[%s7 + $0x78] sm:$0xff]
  %v1668 = vld [vmem:[%s7 + $0x80] sm:$0xff]
  %v1669 = vld [vmem:[%s7 + $0x88] sm:$0xff]
  %v1670 = vld [vmem:[%s7 + $0x90] sm:$0xff]
  %v1671 = vld [vmem:[%s7 + $0x98] sm:$0xff]
  %v1672 = vld [vmem:[%s7 + $0xa0] sm:$0xff]
  %v1673 = vld [vmem:[%s7 + $0xa8] sm:$0xff]
  %v1674 = vld [vmem:[%s7 + $0xb0] sm:$0xff]
  %v1675 = vld [vmem:[%s7 + $0xb8] sm:$0xff]
  %v1676 = vld [vmem:[%s7 + $0xc0] sm:$0xff]
  %v1677 = vld [vmem:[%s7 + $0xc8] sm:$0xff]
  %v1678 = vld [vmem:[%s7 + $0xd0] sm:$0xff]
  %v1679 = vld [vmem:[%s7 + $0xd8] sm:$0xff]
  %v1680 = vld [vmem:[%s7 + $0xe0] sm:$0xff]
  %v1681 = vld [vmem:[%s7 + $0xe8] sm:$0xff]
  %v1682 = vld [vmem:[%s7 + $0xf0] sm:$0xff]
  %v1683 = vld [vmem:[%s7 + $0xf8] sm:$0xff]
  %vm1688 = vcmask 1041409
  %v1689 = vsel %vm1688, %v1644, %v1630
  %v1690 = vsel %vm1688, %v1651, %v1637
  %1693 = vmatpush.msra.mxu0 %v1667
  %1694 = vmatpush.msra.mxu0 %v1666
  %1695 = vmatpush.msra.mxu0 %v1665
  %1696 = vmatpush.msra.mxu0 %v1664
  %1697 = vmatpush.msra.mxu0 %v1663
  %1698 = vmatpush.msra.mxu0 %v1662
  %1699 = vmatpush.msra.mxu0 %v1661
  %1700 = vmatpush.msra.mxu0 %v1660
  %1701 = vmatpush.msra.mxu0 %v1659
  %1702 = vmatpush.msra.mxu0 %v1658
  %1703 = vmatpush.msra.mxu0 %v1657
  %1704 = vmatpush.msra.mxu0 %v1656
  %1705 = vmatpush.msra.mxu0 %v1655
  %1706 = vmatpush.msra.mxu0 %v1654
  %1707 = vmatpush.msra.mxu0 %v1653
  %1708 = vmatpush.msra.mxu0 %v1652
  %1709 = vmatmul.f32.gmra.mxu0 %v1689
  %v1710 = vpop.f32.mrf.mxu0
  %v1711 = vadd.f32 0.0, %v1710
  %1712 = vdwg.mxu0
  %1713 = vmatpush.msra.mxu0 %v1683
  %1714 = vmatpush.msra.mxu0 %v1682
  %1715 = vmatpush.msra.mxu0 %v1681
  %1716 = vmatpush.msra.mxu0 %v1680
  %1717 = vmatpush.msra.mxu0 %v1679
  %1718 = vmatpush.msra.mxu0 %v1678
  %1719 = vmatpush.msra.mxu0 %v1677
  %1720 = vmatpush.msra.mxu0 %v1676
  %1721 = vmatpush.msra.mxu0 %v1675
  %1722 = vmatpush.msra.mxu0 %v1674
  %1723 = vmatpush.msra.mxu0 %v1673
  %1724 = vmatpush.msra.mxu0 %v1672
  %1725 = vmatpush.msra.mxu0 %v1671
  %1726 = vmatpush.msra.mxu0 %v1670
  %1727 = vmatpush.msra.mxu0 %v1669
  %1728 = vmatpush.msra.mxu0 %v1668
  %1729 = vmatmul.f32.gmra.mxu0 %v1690
  %v1730 = vpop.f32.mrf.mxu0
  %v1731 = vadd.f32 %v1711, %v1730
  %1732 = vdwg.mxu0
  %v1733 = vld [vmem:[%s8] sm:$0xff]
  %v1734 = vld [vmem:[%s8 + $0x8] sm:$0xff]
  %v1736 = vsel %vm202, %v1731, 0
  %1738 = vmatpush.msra.mxu0 0.0
  %1739 = vmatpush.msra.mxu0 0.0
  %1740 = vmatpush.msra.mxu0 0.0
  %1741 = vmatpush.msra.mxu0 0.0
  %1742 = vmatpush.msra.mxu0 0.0
  %1743 = vmatpush.msra.mxu0 0.0
  %1744 = vmatpush.msra.mxu0 0.0
  %1745 = vmatpush.msra.mxu0 0.0
  %1746 = vmatpush.msra.mxu0 0.0
  %1747 = vmatpush.msra.mxu0 0.0
  %1748 = vmatpush.msra.mxu0 0.0
  %1749 = vmatpush.msra.mxu0 0.0
  %1750 = vmatpush.msra.mxu0 0.0
  %1751 = vmatpush.msra.mxu0 0.0
  %1752 = vmatpush.msra.mxu0 %v1734
  %1753 = vmatpush.msra.mxu0 %v1733
  %1754 = vmatmul.f32.gmra.mxu0 %v1736
  %v1755 = vpop.f32.mrf.mxu0
  %v1756 = vadd.f32 0.0, %v1755
  %1757 = vdwg.mxu0
  %v1758 = vmax.f32 %v1756, 0.0
  %v1759 = vld [vmem:[%s9] sm:$0xff]
  %1761 = vst [vmem:[#allocation1] ss:$2 sm:$0xff] %v1759
  %v1762 = vld.sshfl [vmem:[#allocation1] sm:$0xff pattern:$0x75316420]
  %v1763 = vld.sshfl [vmem:[#allocation1 + $0x8] sm:$0xff pattern:$0x75316420]
  %vm1764 = vcmask 31744
  %v1766 = vsel %vm1764, %v1758, 0
  %v1768 = vsel %vm552, %v1762, 0
  %v1770 = vsel %vm552, %v1763, 0
  %1772 = vmatpush.msra.mxu0 0.0
  %1773 = vmatpush.msra.mxu0 0.0
  %1774 = vmatpush.msra.mxu0 0.0
  %1775 = vmatpush.msra.mxu0 0.0
  %1776 = vmatpush.msra.mxu0 0.0
  %1777 = vmatpush.msra.mxu0 0.0
  %1778 = vmatpush.msra.mxu0 0.0
  %1779 = vmatpush.msra.mxu0 0.0
  %1780 = vmatpush.msra.mxu0 0.0
  %1781 = vmatpush.msra.mxu0 0.0
  %1782 = vmatpush.msra.mxu0 0.0
  %1783 = vmatpush.msra.mxu0 0.0
  %1784 = vmatpush.msra.mxu0 0.0
  %1785 = vmatpush.msra.mxu0 0.0
  %1786 = vmatpush.msra.mxu0 0.0
  %1787 = vmatpush.msra.mxu0 %v1768
  %1788 = vmatmul.f32.gmra.mxu0 %v1766
  %v1789 = vpop.f32.mrf.mxu0
  %v1790 = vadd.f32 3.0, %v1789
  %1791 = vdwg.mxu0
  %1792 = vmatpush.msra.mxu0 0.0
  %1793 = vmatpush.msra.mxu0 0.0
  %1794 = vmatpush.msra.mxu0 0.0
  %1795 = vmatpush.msra.mxu0 0.0
  %1796 = vmatpush.msra.mxu0 0.0
  %1797 = vmatpush.msra.mxu0 0.0
  %1798 = vmatpush.msra.mxu0 0.0
  %1799 = vmatpush.msra.mxu0 0.0
  %1800 = vmatpush.msra.mxu0 0.0
  %1801 = vmatpush.msra.mxu0 0.0
  %1802 = vmatpush.msra.mxu0 0.0
  %1803 = vmatpush.msra.mxu0 0.0
  %1804 = vmatpush.msra.mxu0 0.0
  %1805 = vmatpush.msra.mxu0 0.0
  %1806 = vmatpush.msra.mxu0 0.0
  %1807 = vmatpush.msra.mxu0 %v1770
  %1808 = vmatmul.f32.gmra.mxu0 %v1766
  %v1809 = vpop.f32.mrf.mxu0
  %v1810 = vadd.f32 3.0, %v1809
  %1811 = vdwg.mxu0
  %v1812 = vmax.f32 %v1790, 0.0
  %v1813 = vmax.f32 %v1810, 0.0
  %v1814 = vmin.f32 %v1812, 6.0
  %v1815 = vmin.f32 %v1813, 6.0
  %v1816 = vmul.f32 %v1814, 0.16666667
  %v1817 = vmul.f32 %v1815, 0.16666667
  %v1820 = vrot.slane %v1817, 7
  %vm1821 = vcmask 1040384
  %v1822 = vsel %vm1821, %v1816, %v1820
  %v1823 = vsel %vm1688, %v1816, %v1820
  %v1824 = vrot.slane %v1823, 1
  %v1825 = vperm.slane %v1822, 0
  %v1826 = vperm.slane %v1822, 1
  %v1827 = vperm.slane %v1824, 0
  %v1828 = vperm.slane %v1824, 1
  %v1833 = vmul.f32 %v1616, %v1825
  %v1834 = vmul.f32 %v1617, %v1826
  %v1835 = vmul.f32 %v1618, %v1825
  %v1836 = vmul.f32 %v1619, %v1826
  %v1837 = vmul.f32 %v1620, %v1827
  %v1838 = vmul.f32 %v1621, %v1828
  %v1839 = vmul.f32 %v1622, %v1827
  %v1840 = vmul.f32 %v1623, %v1828
  %v1841 = vadd.f32 %v1833, 3.0
  %v1842 = vadd.f32 %v1834, 3.0
  %v1843 = vadd.f32 %v1835, 3.0
  %v1844 = vadd.f32 %v1836, 3.0
  %v1845 = vadd.f32 %v1837, 3.0
  %v1846 = vadd.f32 %v1838, 3.0
  %v1847 = vadd.f32 %v1839, 3.0
  %v1848 = vadd.f32 %v1840, 3.0
  %v1849 = vmax.f32 %v1841, 0.0
  %v1850 = vmax.f32 %v1842, 0.0
  %v1851 = vmax.f32 %v1843, 0.0
  %v1852 = vmax.f32 %v1844, 0.0
  %v1853 = vmax.f32 %v1845, 0.0
  %v1854 = vmax.f32 %v1846, 0.0
  %v1855 = vmax.f32 %v1847, 0.0
  %v1856 = vmax.f32 %v1848, 0.0
  %v1857 = vmin.f32 %v1849, 6.0
  %v1858 = vmin.f32 %v1850, 6.0
  %v1859 = vmin.f32 %v1851, 6.0
  %v1860 = vmin.f32 %v1852, 6.0
  %v1861 = vmin.f32 %v1853, 6.0
  %v1862 = vmin.f32 %v1854, 6.0
  %v1863 = vmin.f32 %v1855, 6.0
  %v1864 = vmin.f32 %v1856, 6.0
  %v1865 = vmul.f32 %v1833, %v1857
  %v1866 = vmul.f32 %v1834, %v1858
  %v1867 = vmul.f32 %v1835, %v1859
  %v1868 = vmul.f32 %v1836, %v1860
  %v1869 = vmul.f32 %v1837, %v1861
  %v1870 = vmul.f32 %v1838, %v1862
  %v1871 = vmul.f32 %v1839, %v1863
  %v1872 = vmul.f32 %v1840, %v1864
  %v1873 = vmul.f32 %v1865, 0.16666667
  %v1874 = vmul.f32 %v1866, 0.16666667
  %v1875 = vmul.f32 %v1867, 0.16666667
  %v1876 = vmul.f32 %v1868, 0.16666667
  %v1877 = vmul.f32 %v1869, 0.16666667
  %v1878 = vmul.f32 %v1870, 0.16666667
  %v1879 = vmul.f32 %v1871, 0.16666667
  %v1880 = vmul.f32 %v1872, 0.16666667
  %v1881 = vld [vmem:[%s10] sm:$0xff]
  %v1882 = vld [vmem:[%s10 + $0x8] sm:$0xff]
  %v1883 = vld [vmem:[%s10 + $0x10] sm:$0xff]
  %v1884 = vld [vmem:[%s10 + $0x18] sm:$0xff]
  %v1885 = vld [vmem:[%s10 + $0x20] sm:$0xff]
  %v1886 = vld [vmem:[%s10 + $0x28] sm:$0xff]
  %v1887 = vld [vmem:[%s10 + $0x30] sm:$0xff]
  %v1888 = vld [vmem:[%s10 + $0x38] sm:$0xff]
  %v1889 = vld [vmem:[%s10 + $0x40] sm:$0xff]
  %v1890 = vld [vmem:[%s10 + $0x48] sm:$0xff]
  %v1891 = vld [vmem:[%s10 + $0x50] sm:$0xff]
  %v1892 = vld [vmem:[%s10 + $0x58] sm:$0xff]
  %v1893 = vld [vmem:[%s10 + $0x60] sm:$0xff]
  %v1894 = vld [vmem:[%s10 + $0x68] sm:$0xff]
  %v1895 = vld [vmem:[%s10 + $0x70] sm:$0xff]
  %v1896 = vld [vmem:[%s10 + $0x78] sm:$0xff]
  %v1897 = vld [vmem:[%s10 + $0x80] sm:$0xff]
  %v1898 = vld [vmem:[%s10 + $0x88] sm:$0xff]
  %v1899 = vld [vmem:[%s10 + $0x90] sm:$0xff]
  %v1900 = vld [vmem:[%s10 + $0x98] sm:$0xff]
  %v1901 = vld [vmem:[%s10 + $0xa0] sm:$0xff]
  %v1902 = vld [vmem:[%s10 + $0xa8] sm:$0xff]
  %v1903 = vld [vmem:[%s10 + $0xb0] sm:$0xff]
  %v1904 = vld [vmem:[%s10 + $0xb8] sm:$0xff]
  %v1905 = vld [vmem:[%s10 + $0xc0] sm:$0xff]
  %v1906 = vld [vmem:[%s10 + $0xc8] sm:$0xff]
  %v1907 = vld [vmem:[%s10 + $0xd0] sm:$0xff]
  %v1908 = vld [vmem:[%s10 + $0xd8] sm:$0xff]
  %v1909 = vld [vmem:[%s10 + $0xe0] sm:$0xff]
  %v1910 = vld [vmem:[%s10 + $0xe8] sm:$0xff]
  %v1911 = vld [vmem:[%s10 + $0xf0] sm:$0xff]
  %v1912 = vld [vmem:[%s10 + $0xf8] sm:$0xff]
  %1913 = vmatpush.msra.mxu0 %v1896
  %1914 = vmatpush.msra.mxu0 %v1895
  %1915 = vmatpush.msra.mxu0 %v1894
  %1916 = vmatpush.msra.mxu0 %v1893
  %1917 = vmatpush.msra.mxu0 %v1892
  %1918 = vmatpush.msra.mxu0 %v1891
  %1919 = vmatpush.msra.mxu0 %v1890
  %1920 = vmatpush.msra.mxu0 %v1889
  %1921 = vmatpush.msra.mxu0 %v1888
  %1922 = vmatpush.msra.mxu0 %v1887
  %1923 = vmatpush.msra.mxu0 %v1886
  %1924 = vmatpush.msra.mxu0 %v1885
  %1925 = vmatpush.msra.mxu0 %v1884
  %1926 = vmatpush.msra.mxu0 %v1883
  %1927 = vmatpush.msra.mxu0 %v1882
  %1928 = vmatpush.msra.mxu0 %v1881
  %1929 = vmatmul.f32.gmra.mxu0 %v1873
  %v1930 = vpop.f32.mrf.mxu0
  %v1931 = vadd.f32 0.0, %v1930
  %1932 = vmatmul.f32.gmra.mxu0 %v1875
  %v1933 = vpop.f32.mrf.mxu0
  %v1934 = vadd.f32 0.0, %v1933
  %1935 = vmatmul.f32.gmra.mxu0 %v1877
  %v1936 = vpop.f32.mrf.mxu0
  %v1937 = vadd.f32 0.0, %v1936
  %1938 = vmatmul.f32.gmra.mxu0 %v1879
  %v1939 = vpop.f32.mrf.mxu0
  %v1940 = vadd.f32 0.0, %v1939
  %1941 = vdwg.mxu0
  %1942 = vmatpush.msra.mxu0 %v1912
  %1943 = vmatpush.msra.mxu0 %v1911
  %1944 = vmatpush.msra.mxu0 %v1910
  %1945 = vmatpush.msra.mxu0 %v1909
  %1946 = vmatpush.msra.mxu0 %v1908
  %1947 = vmatpush.msra.mxu0 %v1907
  %1948 = vmatpush.msra.mxu0 %v1906
  %1949 = vmatpush.msra.mxu0 %v1905
  %1950 = vmatpush.msra.mxu0 %v1904
  %1951 = vmatpush.msra.mxu0 %v1903
  %1952 = vmatpush.msra.mxu0 %v1902
  %1953 = vmatpush.msra.mxu0 %v1901
  %1954 = vmatpush.msra.mxu0 %v1900
  %1955 = vmatpush.msra.mxu0 %v1899
  %1956 = vmatpush.msra.mxu0 %v1898
  %1957 = vmatpush.msra.mxu0 %v1897
  %1958 = vmatmul.f32.gmra.mxu0 %v1874
  %v1959 = vpop.f32.mrf.mxu0
  %v1960 = vadd.f32 %v1931, %v1959
  %1961 = vmatmul.f32.gmra.mxu0 %v1876
  %v1962 = vpop.f32.mrf.mxu0
  %v1963 = vadd.f32 %v1934, %v1962
  %1964 = vmatmul.f32.gmra.mxu0 %v1878
  %v1965 = vpop.f32.mrf.mxu0
  %v1966 = vadd.f32 %v1937, %v1965
  %1967 = vmatmul.f32.gmra.mxu0 %v1880
  %v1968 = vpop.f32.mrf.mxu0
  %v1969 = vadd.f32 %v1940, %v1968
  %1970 = vdwg.mxu0
  %v1971 = vld [vmem:[%s11] sm:$0x1]
  %v1973 = vperm.slane %v1971, 0
  %v1975 = vmul.f32 %v1960, %v1973
  %v1976 = vmul.f32 %v1963, %v1973
  %v1977 = vmul.f32 %v1966, %v1973
  %v1978 = vmul.f32 %v1969, %v1973
  %v1979 = vld [vmem:[%s12] sm:$0x1]
  %v1981 = vperm.slane %v1979, 0
  %v1983 = vadd.f32 %v1975, %v1981
  %v1984 = vadd.f32 %v1976, %v1981
  %v1985 = vadd.f32 %v1977, %v1981
  %v1986 = vadd.f32 %v1978, %v1981
  %v1987 = vrot.slane %v44, 1
  %v1988 = vrot.slane %v46, 1
  %v1989 = vsel %vm984, %v1987, %v1988
  %v1990 = vrot.slane %v45, 1
  %v1991 = vrot.slane %v47, 1
  %v1992 = vsel %vm984, %v1990, %v1991
  %v1993 = vrot.slane %v48, 1
  %v1994 = vsel %vm984, %v1988, %v1993
  %v1995 = vrot.slane %v49, 1
  %v1996 = vsel %vm984, %v1991, %v1995
  %v1997 = vrot.slane %v50, 1
  %v1998 = vrot.slane %v52, 1
  %v1999 = vsel %vm984, %v1997, %v1998
  %v2000 = vrot.slane %v51, 1
  %v2001 = vrot.slane %v53, 1
  %v2002 = vsel %vm984, %v2000, %v2001
  %v2003 = vrot.slane %v54, 1
  %v2004 = vsel %vm984, %v1998, %v2003
  %v2005 = vrot.slane %v55, 1
  %v2006 = vsel %vm984, %v2001, %v2005
  %2007 = vrot.lane.b32.xlu0 %v1989, 120
  %v2008 = vpop.permute.xlu0 %2007
  %2009 = vrot.lane.b32.xlu0 %v1992, 120
  %v2010 = vpop.permute.xlu0 %2009
  %2011 = vrot.lane.b32.xlu0 %v1994, 120
  %v2012 = vpop.permute.xlu0 %2011
  %2013 = vrot.lane.b32.xlu0 %v1996, 120
  %v2014 = vpop.permute.xlu0 %2013
  %2015 = vrot.lane.b32.xlu0 %v1999, 120
  %v2016 = vpop.permute.xlu0 %2015
  %2017 = vrot.lane.b32.xlu0 %v2002, 120
  %v2018 = vpop.permute.xlu0 %2017
  %2019 = vrot.lane.b32.xlu0 %v2004, 120
  %v2020 = vpop.permute.xlu0 %2019
  %2021 = vrot.lane.b32.xlu0 %v2006, 120
  %v2022 = vpop.permute.xlu0 %2021
  %vm2023 = vcmask 982016
  %v2024 = vsel %vm2023, %v2008, %v2010
  %v2025 = vsel %vm2023, %v2012, %v2014
  %v2026 = vsel %vm2023, %v2016, %v2018
  %v2027 = vsel %vm2023, %v2020, %v2022
  %v2032 = vadd.f32 %v1983, %v2024
  %v2033 = vadd.f32 %v1984, %v2025
  %v2034 = vadd.f32 %v1985, %v2026
  %v2035 = vadd.f32 %v1986, %v2027
  %2036 = vst [vmem:[%s13] sm:$0xff] %v2032
  %2037 = vst [vmem:[%s13 + $0x8] sm:$0xff] %v2033
  %2038 = vst [vmem:[%s13 + $0x10] sm:$0xff] %v2034
  %2039 = vst [vmem:[%s13 + $0x18] sm:$0xff] %v2035
  // Predicated region
  $region54: #{mobile_bottleneck_pallas.1} parent=0 // pred_check
    _
  $region55: #{mobile_bottleneck_pallas.1} parent=0 // pred_check_branch
    %2041 = sbr.rel (0) target = $region57
  $region56: #{mobile_bottleneck_pallas.1} parent=0 // pred_region
    _
  $region57: #{mobile_bottleneck_pallas.1} parent=0 // pred_fallthru
    _
  // Predicated region
  $region58: #{mobile_bottleneck_pallas.1} parent=0 // pred_check
    _
  $region59: #{mobile_bottleneck_pallas.1} parent=0 // pred_check_branch
    %2043 = sbr.rel (0) target = $region61
  $region60: #{mobile_bottleneck_pallas.1} parent=0 // pred_region
    _
  $region61: #{mobile_bottleneck_pallas.1} parent=0 // pred_fallthru
    _

</llo_original>
